<compile_context>
chip_gen: v6e
topology: v6e:2x2x1
jax: 0.10.0
libtpu: 0.0.40
codegen_flags: <defaults>
</compile_context>

<pallas_src>
import jax
import jax.numpy as jnp
from jax.experimental import pallas as pl
from jax.experimental.pallas import tpu as pltpu

_LANE = 128       # lane width (last-dim granularity)
_ROW_ALIGN = 16   # batch-tile row granularity (bf16 sublane packing)


def _round_up(n, m):
    return ((n + m - 1) // m) * m


def autoencoder_kernel(x_ref,
                       w1_ref, b1_ref,   # encoder layer 1: first_layer -> layer_1
                       w2_ref, b2_ref,   # encoder layer 2: layer_1 -> layer_2
                       w3_ref, b3_ref,   # decoder layer 1: layer_2 -> layer_1
                       w4_ref, b4_ref,   # decoder layer 2: layer_1 -> first_layer
                       enc_ref, dec_ref):
    # x arrives in its original f32; cast to bf16 on the VPU just before the
    # MXU (hidden under DMA/MXU instead of a separate XLA pass over HBM).
    x = x_ref[...].astype(w1_ref.dtype)

    # ---- encoder ----
    h1 = jnp.dot(x, w1_ref[...], preferred_element_type=jnp.float32) + b1_ref[...]
    h1 = jnp.maximum(h1, 0.0)
    enc = jnp.dot(h1.astype(w2_ref.dtype), w2_ref[...],
                  preferred_element_type=jnp.float32) + b2_ref[...]
    enc = jnp.maximum(enc, 0.0)
    # Store only the real latent columns (block last dim == full output dim).
    enc_ref[...] = enc[:, :enc_ref.shape[-1]].astype(enc_ref.dtype)

    # ---- decoder ---- (uses the lane-padded latent; padded columns are exactly 0)
    h3 = jnp.dot(enc.astype(w3_ref.dtype), w3_ref[...],
                 preferred_element_type=jnp.float32) + b3_ref[...]
    h3 = jnp.maximum(h3, 0.0)
    dec = jnp.dot(h3.astype(w4_ref.dtype), w4_ref[...],
                  preferred_element_type=jnp.float32) + b4_ref[...]
    dec_ref[...] = dec.astype(dec_ref.dtype)


def make_autoencoder(params, *, tm=512, compute_dtype=jnp.bfloat16,
                     out_dtype=jnp.bfloat16):
    """Pad + cast the weights ONCE, return a jitted forward(x) -> (enc, dec).

    params = (w1, b1, w2, b2, w3, b3, w4, b4); weights stored [in, out],
    biases [1, out] (torch nn.Linear weights transposed).
    Pass out_dtype=jnp.float32 for bit-closer parity with the f32 torch module
    (costs ~2x the output HBM traffic on this memory-bound kernel).
    """
    w1, b1, w2, b2, w3, b3, w4, b4 = params
    first_layer, layer_1 = w1.shape
    layer_2 = w2.shape[1]

    # Only the *internal* feature dims are lane-padded (done once, here).
    # Zero-padded weight rows/cols + zero biases keep padded activation columns
    # exactly zero through every ReLU, so the math is unchanged.
    l1_p = _round_up(layer_1, _LANE)
    l2_p = _round_up(layer_2, _LANE)

    def pad2(a, rows, cols, dtype):
        a = jnp.asarray(a, dtype)
        return jnp.pad(a, ((0, rows - a.shape[0]), (0, cols - a.shape[1])))

    w1p = pad2(w1, first_layer, l1_p, compute_dtype)
    b1p = pad2(b1, 1, l1_p, jnp.float32)
    w2p = pad2(w2, l1_p, l2_p, compute_dtype)
    b2p = pad2(b2, 1, l2_p, jnp.float32)
    w3p = pad2(w3, l2_p, l1_p, compute_dtype)
    b3p = pad2(b3, 1, l1_p, jnp.float32)
    w4p = pad2(w4, l1_p, first_layer, compute_dtype)
    b4p = pad2(b4, 1, first_layer, jnp.float32)
    prepared = (w1p, b1p, w2p, b2p, w3p, b3p, w4p, b4p)
    param_bytes = sum(int(a.size) * a.dtype.itemsize for a in prepared)
    out_isz = jnp.dtype(out_dtype).itemsize

    def _pick_tile(batch):
        # >= 2 grid steps when the batch allows (keeps both v7x TensorCores busy
        # under "parallel"); rows a multiple of 16; minimal tail padding.
        num_steps = max(2, pl.cdiv(batch, tm))
        tile = min(tm, _round_up(pl.cdiv(batch, num_steps), _ROW_ALIGN))
        batch_p = _round_up(batch, tile)
        return tile, batch_p

    @jax.jit
    def forward(x):
        batch, fl = x.shape
        assert fl == first_layer, (fl, first_layer)
        tile, batch_p = _pick_tile(batch)
        xp = x if batch_p == batch else jnp.pad(x, ((0, batch_p - batch), (0, 0)))

        grid = (batch_p // tile,)

        def resident(shape):
            # Constant block index -> DMA'd once, stays resident in VMEM.
            return pl.BlockSpec(shape, lambda i: (0, 0))

        in_specs = [
            pl.BlockSpec((tile, first_layer), lambda i: (i, 0)),   # x tile (pipelined)
            resident(w1p.shape), resident(b1p.shape),
            resident(w2p.shape), resident(b2p.shape),
            resident(w3p.shape), resident(b3p.shape),
            resident(w4p.shape), resident(b4p.shape),
        ]
        out_specs = (
            pl.BlockSpec((tile, layer_2), lambda i: (i, 0)),       # x_encoder
            pl.BlockSpec((tile, first_layer), lambda i: (i, 0)),   # x_decoder
        )

        flops = 2 * batch_p * (first_layer * l1_p + l1_p * l2_p
                               + l2_p * l1_p + l1_p * first_layer)
        bytes_accessed = (batch_p * first_layer * x.dtype.itemsize
                          + param_bytes
                          + batch_p * (layer_2 + first_layer) * out_isz)

        enc_p, dec_p = pl.pallas_call(
            autoencoder_kernel,
            out_shape=(
                jax.ShapeDtypeStruct((batch_p, layer_2), out_dtype),
                jax.ShapeDtypeStruct((batch_p, first_layer), out_dtype),
            ),
            grid=grid,
            in_specs=in_specs,
            out_specs=out_specs,
            compiler_params=pltpu.CompilerParams(
                dimension_semantics=("parallel",),
                vmem_limit_bytes=32 * 1024 * 1024,
            ),
            cost_estimate=pl.CostEstimate(
                flops=int(flops), transcendentals=0,
                bytes_accessed=int(bytes_accessed)),
        )(xp, *prepared)

        if batch_p != batch:   # strip batch padding only when it exists
            enc_p = enc_p[:batch]
            dec_p = dec_p[:batch]
        return enc_p, dec_p

    return forward


def init_params(key, first_layer, layer_1, layer_2, dtype=jnp.float32):
    """Deterministic synthetic params matching nn.Linear shapes (stored [in, out])."""
    dims = [(first_layer, layer_1), (layer_1, layer_2),
            (layer_2, layer_1), (layer_1, first_layer)]
    params = []
    keys = jax.random.split(key, 2 * len(dims))
    for i, (d_in, d_out) in enumerate(dims):
        bound = 1.0 / (d_in ** 0.5)   # torch.nn.Linear default init range
        w = jax.random.uniform(keys[2 * i], (d_in, d_out), dtype, -bound, bound)
        b = jax.random.uniform(keys[2 * i + 1], (1, d_out), dtype, -bound, bound)
        params += [w, b]
    return tuple(params)


def reference_forward(x, params):
    w1, b1, w2, b2, w3, b3, w4, b4 = params
    h1 = jnp.maximum(x @ w1 + b1, 0.0)
    enc = jnp.maximum(h1 @ w2 + b2, 0.0)
    h3 = jnp.maximum(enc @ w3 + b3, 0.0)
    dec = h3 @ w4 + b4
    return enc, dec


if __name__ == "__main__":
    first_layer, layer_1, layer_2 = 256, 128, 64
    batch = 512   # splits into two 256-row tiles -> exercises the batch grid

    key = jax.random.PRNGKey(0)
    k_x, k_p = jax.random.split(key)
    x = jax.random.normal(k_x, (batch, first_layer), jnp.float32)
    params = init_params(k_p, first_layer, layer_1, layer_2)

    forward = make_autoencoder(params, tm=512)
    enc, dec = forward(x)
    jax.block_until_ready((enc, dec))

    enc_ref, dec_ref = reference_forward(x, params)
    assert enc.shape == (batch, layer_2) and dec.shape == (batch, first_layer)
    enc32 = enc.astype(jnp.float32)
    dec32 = dec.astype(jnp.float32)
    # bf16 MXU operands / bf16 outputs with f32 accumulation -> relaxed tolerance.
    assert jnp.allclose(enc32, enc_ref, atol=5e-2, rtol=5e-2), \
        float(jnp.max(jnp.abs(enc32 - enc_ref)))
    assert jnp.allclose(dec32, dec_ref, atol=5e-2, rtol=5e-2), \
        float(jnp.max(jnp.abs(dec32 - dec_ref)))

    print("KERNEL_OK")
</pallas_src>

<mosaic_0001>
module attributes {stable_mosaic.version = 11 : i64} {
  func.func @autoencoder_kernel(%arg0: i32, %arg1: memref<256x256xf32, #tpu.memory_space<vmem>>, %arg2: memref<256x128xbf16, #tpu.memory_space<vmem>>, %arg3: memref<1x128xf32, #tpu.memory_space<vmem>>, %arg4: memref<128x128xbf16, #tpu.memory_space<vmem>>, %arg5: memref<1x128xf32, #tpu.memory_space<vmem>>, %arg6: memref<128x128xbf16, #tpu.memory_space<vmem>>, %arg7: memref<1x128xf32, #tpu.memory_space<vmem>>, %arg8: memref<128x256xbf16, #tpu.memory_space<vmem>>, %arg9: memref<1x256xf32, #tpu.memory_space<vmem>>, %arg10: memref<256x64xbf16, #tpu.memory_space<vmem>>, %arg11: memref<256x256xbf16, #tpu.memory_space<vmem>>) attributes {dimension_semantics = [#tpu.dimension_semantics<parallel>], iteration_bounds = array<i64: 2>, scalar_prefetch = 0 : i64, scratch_operands = 0 : i64, tpu.core_type = #tpu.core_type<tc>, window_params = [{transform_indices = @transform_0, window_bounds = array<i64: 256, 256>}, {pipeline_mode = #tpu.pipeline_mode<synchronous>, transform_indices = @transform_1, window_bounds = array<i64: 256, 128>}, {pipeline_mode = #tpu.pipeline_mode<synchronous>, transform_indices = @transform_2, window_bounds = array<i64: 1, 128>}, {pipeline_mode = #tpu.pipeline_mode<synchronous>, transform_indices = @transform_3, window_bounds = array<i64: 128, 128>}, {pipeline_mode = #tpu.pipeline_mode<synchronous>, transform_indices = @transform_4, window_bounds = array<i64: 1, 128>}, {pipeline_mode = #tpu.pipeline_mode<synchronous>, transform_indices = @transform_5, window_bounds = array<i64: 128, 128>}, {pipeline_mode = #tpu.pipeline_mode<synchronous>, transform_indices = @transform_6, window_bounds = array<i64: 1, 128>}, {pipeline_mode = #tpu.pipeline_mode<synchronous>, transform_indices = @transform_7, window_bounds = array<i64: 128, 256>}, {pipeline_mode = #tpu.pipeline_mode<synchronous>, transform_indices = @transform_8, window_bounds = array<i64: 1, 256>}, {transform_indices = @transform_9, window_bounds = array<i64: 256, 64>}, {transform_indices = @transform_10, window_bounds = array<i64: 256, 256>}]} {
    %c0 = arith.constant 0 : index
    %c0_0 = arith.constant 0 : index
    %0 = vector.load %arg1[%c0, %c0_0] : memref<256x256xf32, #tpu.memory_space<vmem>>, vector<256x256xf32>
    %1 = arith.truncf %0 : vector<256x256xf32> to vector<256x256xbf16>
    %c0_1 = arith.constant 0 : index
    %c0_2 = arith.constant 0 : index
    %2 = vector.load %arg2[%c0_1, %c0_2] : memref<256x128xbf16, #tpu.memory_space<vmem>>, vector<256x128xbf16>
    %cst = arith.constant dense<0.000000e+00> : vector<256x128xf32>
    %3 = tpu.matmul %1, %2, %cst {dimension_numbers = #tpu.dot_dimension_numbers<[1], [0], [0], [1], [0, 0, 1, 1], [], []>} : vector<256x256xbf16>, vector<256x128xbf16>, vector<256x128xf32> -> vector<256x128xf32>
    %c0_3 = arith.constant 0 : index
    %c0_4 = arith.constant 0 : index
    %4 = vector.load %arg3[%c0_3, %c0_4] : memref<1x128xf32, #tpu.memory_space<vmem>>, vector<1x128xf32>
    %5 = vector.broadcast %4 : vector<1x128xf32> to vector<256x128xf32>
    %6 = arith.addf %3, %5 : vector<256x128xf32>
    %cst_5 = arith.constant 0.000000e+00 : f32
    %7 = vector.broadcast %cst_5 : f32 to vector<256x128xf32>
    %8 = arith.maximumf %6, %7 : vector<256x128xf32>
    %9 = arith.truncf %8 : vector<256x128xf32> to vector<256x128xbf16>
    %c0_6 = arith.constant 0 : index
    %c0_7 = arith.constant 0 : index
    %10 = vector.load %arg4[%c0_6, %c0_7] : memref<128x128xbf16, #tpu.memory_space<vmem>>, vector<128x128xbf16>
    %cst_8 = arith.constant dense<0.000000e+00> : vector<256x128xf32>
    %11 = tpu.matmul %9, %10, %cst_8 {dimension_numbers = #tpu.dot_dimension_numbers<[1], [0], [0], [1], [0, 0, 1, 1], [], []>} : vector<256x128xbf16>, vector<128x128xbf16>, vector<256x128xf32> -> vector<256x128xf32>
    %c0_9 = arith.constant 0 : index
    %c0_10 = arith.constant 0 : index
    %12 = vector.load %arg5[%c0_9, %c0_10] : memref<1x128xf32, #tpu.memory_space<vmem>>, vector<1x128xf32>
    %13 = vector.broadcast %12 : vector<1x128xf32> to vector<256x128xf32>
    %14 = arith.addf %11, %13 : vector<256x128xf32>
    %cst_11 = arith.constant 0.000000e+00 : f32
    %15 = vector.broadcast %cst_11 : f32 to vector<256x128xf32>
    %16 = arith.maximumf %14, %15 : vector<256x128xf32>
    %17 = vector.extract_strided_slice %16 {offsets = [0, 0], sizes = [256, 64], strides = [1, 1]} : vector<256x128xf32> to vector<256x64xf32>
    %18 = arith.truncf %17 : vector<256x64xf32> to vector<256x64xbf16>
    %c0_12 = arith.constant 0 : index
    %c0_13 = arith.constant 0 : index
    %19 = vector.load %arg10[%c0_12, %c0_13] : memref<256x64xbf16, #tpu.memory_space<vmem>>, vector<256x64xbf16>
    tpu.vector_store %arg10[%c0_12, %c0_13], %18 {strides = array<i32>} : memref<256x64xbf16, #tpu.memory_space<vmem>>, vector<256x64xbf16>,
    %20 = arith.truncf %16 : vector<256x128xf32> to vector<256x128xbf16>
    %c0_14 = arith.constant 0 : index
    %c0_15 = arith.constant 0 : index
    %21 = vector.load %arg6[%c0_14, %c0_15] : memref<128x128xbf16, #tpu.memory_space<vmem>>, vector<128x128xbf16>
    %cst_16 = arith.constant dense<0.000000e+00> : vector<256x128xf32>
    %22 = tpu.matmul %20, %21, %cst_16 {dimension_numbers = #tpu.dot_dimension_numbers<[1], [0], [0], [1], [0, 0, 1, 1], [], []>} : vector<256x128xbf16>, vector<128x128xbf16>, vector<256x128xf32> -> vector<256x128xf32>
    %c0_17 = arith.constant 0 : index
    %c0_18 = arith.constant 0 : index
    %23 = vector.load %arg7[%c0_17, %c0_18] : memref<1x128xf32, #tpu.memory_space<vmem>>, vector<1x128xf32>
    %24 = vector.broadcast %23 : vector<1x128xf32> to vector<256x128xf32>
    %25 = arith.addf %22, %24 : vector<256x128xf32>
    %cst_19 = arith.constant 0.000000e+00 : f32
    %26 = vector.broadcast %cst_19 : f32 to vector<256x128xf32>
    %27 = arith.maximumf %25, %26 : vector<256x128xf32>
    %28 = arith.truncf %27 : vector<256x128xf32> to vector<256x128xbf16>
    %c0_20 = arith.constant 0 : index
    %c0_21 = arith.constant 0 : index
    %29 = vector.load %arg8[%c0_20, %c0_21] : memref<128x256xbf16, #tpu.memory_space<vmem>>, vector<128x256xbf16>
    %cst_22 = arith.constant dense<0.000000e+00> : vector<256x256xf32>
    %30 = tpu.matmul %28, %29, %cst_22 {dimension_numbers = #tpu.dot_dimension_numbers<[1], [0], [0], [1], [0, 0, 1, 1], [], []>} : vector<256x128xbf16>, vector<128x256xbf16>, vector<256x256xf32> -> vector<256x256xf32>
    %c0_23 = arith.constant 0 : index
    %c0_24 = arith.constant 0 : index
    %31 = vector.load %arg9[%c0_23, %c0_24] : memref<1x256xf32, #tpu.memory_space<vmem>>, vector<1x256xf32>
    %32 = vector.broadcast %31 : vector<1x256xf32> to vector<256x256xf32>
    %33 = arith.addf %30, %32 : vector<256x256xf32>
    %34 = arith.truncf %33 : vector<256x256xf32> to vector<256x256xbf16>
    %c0_25 = arith.constant 0 : index
    %c0_26 = arith.constant 0 : index
    %35 = vector.load %arg11[%c0_25, %c0_26] : memref<256x256xbf16, #tpu.memory_space<vmem>>, vector<256x256xbf16>
    tpu.vector_store %arg11[%c0_25, %c0_26], %34 {strides = array<i32>} : memref<256x256xbf16, #tpu.memory_space<vmem>>, vector<256x256xbf16>,
    return
  }
  func.func @transform_0(%arg0: i32) -> (i32, i32) {
    %c0_i32 = arith.constant 0 : i32
    %c0_i32_0 = arith.constant 0 : i32
    return %arg0, %c0_i32 : i32, i32
  }
  func.func @transform_1(%arg0: i32) -> (i32, i32) {
    %c0_i32 = arith.constant 0 : i32
    %c0_i32_0 = arith.constant 0 : i32
    %c0_i32_1 = arith.constant 0 : i32
    return %c0_i32, %c0_i32_0 : i32, i32
  }
  func.func @transform_2(%arg0: i32) -> (i32, i32) {
    %c0_i32 = arith.constant 0 : i32
    %c0_i32_0 = arith.constant 0 : i32
    %c0_i32_1 = arith.constant 0 : i32
    return %c0_i32, %c0_i32_0 : i32, i32
  }
  func.func @transform_3(%arg0: i32) -> (i32, i32) {
    %c0_i32 = arith.constant 0 : i32
    %c0_i32_0 = arith.constant 0 : i32
    %c0_i32_1 = arith.constant 0 : i32
    return %c0_i32, %c0_i32_0 : i32, i32
  }
  func.func @transform_4(%arg0: i32) -> (i32, i32) {
    %c0_i32 = arith.constant 0 : i32
    %c0_i32_0 = arith.constant 0 : i32
    %c0_i32_1 = arith.constant 0 : i32
    return %c0_i32, %c0_i32_0 : i32, i32
  }
  func.func @transform_5(%arg0: i32) -> (i32, i32) {
    %c0_i32 = arith.constant 0 : i32
    %c0_i32_0 = arith.constant 0 : i32
    %c0_i32_1 = arith.constant 0 : i32
    return %c0_i32, %c0_i32_0 : i32, i32
  }
  func.func @transform_6(%arg0: i32) -> (i32, i32) {
    %c0_i32 = arith.constant 0 : i32
    %c0_i32_0 = arith.constant 0 : i32
    %c0_i32_1 = arith.constant 0 : i32
    return %c0_i32, %c0_i32_0 : i32, i32
  }
  func.func @transform_7(%arg0: i32) -> (i32, i32) {
    %c0_i32 = arith.constant 0 : i32
    %c0_i32_0 = arith.constant 0 : i32
    %c0_i32_1 = arith.constant 0 : i32
    return %c0_i32, %c0_i32_0 : i32, i32
  }
  func.func @transform_8(%arg0: i32) -> (i32, i32) {
    %c0_i32 = arith.constant 0 : i32
    %c0_i32_0 = arith.constant 0 : i32
    %c0_i32_1 = arith.constant 0 : i32
    return %c0_i32, %c0_i32_0 : i32, i32
  }
  func.func @transform_9(%arg0: i32) -> (i32, i32) {
    %c0_i32 = arith.constant 0 : i32
    %c0_i32_0 = arith.constant 0 : i32
    return %arg0, %c0_i32 : i32, i32
  }
  func.func @transform_10(%arg0: i32) -> (i32, i32) {
    %c0_i32 = arith.constant 0 : i32
    %c0_i32_0 = arith.constant 0 : i32
    return %arg0, %c0_i32 : i32, i32
  }
}

</mosaic_0001>

<llo_original>
// kernel: forward.1
$region0: #{forward.1}
  #allocation0 [shape = 'u32[]', space=smem, size = 0x4, offset = 0x4, fixed_abs, tag = 'smem constant byte address 0x4 - core index']
  #allocation1 [shape = 'u32[144,128]{1,0:T(1,128)}', space=vmem, size = 0x12000, scoped, tag = 'internal scratch']
  %s0 = inlined_call_operand.hbm [shape: f32[512,256], index: 0, kind: input, shape index: {}]
  %s1 = inlined_call_operand.hbm [shape: bf16[256,128], index: 1, kind: input, shape index: {}]
  %s2 = inlined_call_operand.hbm [shape: f32[1,128], index: 2, kind: input, shape index: {}]
  %s3 = inlined_call_operand.hbm [shape: bf16[128,128], index: 3, kind: input, shape index: {}]
  %s4 = inlined_call_operand.vmem [shape: f32[1,128], index: 4, kind: input, shape index: {}]
  %s5 = inlined_call_operand.hbm [shape: bf16[128,128], index: 5, kind: input, shape index: {}]
  %s6 = inlined_call_operand.vmem [shape: f32[1,128], index: 6, kind: input, shape index: {}]
  %s7 = inlined_call_operand.hbm [shape: bf16[128,256], index: 7, kind: input, shape index: {}]
  %s8 = inlined_call_operand.vmem [shape: f32[1,256], index: 8, kind: input, shape index: {}]
  %s9 = inlined_call_operand.vmem [shape: bf16[512,64], index: 9, kind: output, shape index: {0}]
  %s10 = inlined_call_operand.hbm [shape: bf16[512,256], index: 10, kind: output, shape index: {1}]
  %11 = xla_tuple %s9, %s10
  %s12 = sld [smem:[#allocation0]]
  $region101: #{forward.1} parent=0
    _
  %s14 = ssub.s32 1, %s12
  %s15 = scalar_select 0, %s14, %s12
  $region1: #{forward.1} parent=0
    #allocation2 [shape = 'u8[524288]{0}', space=vmem, size = 0x80000, scoped, tag = 'input window, operand 0']
    #allocation3 [shape = 's32[2]{0}', space=sflag, size = 0x8, scoped, tag = 'scoped memory for forward.1']
    #allocation4 [shape = 's32[2]{0}', space=sflag, size = 0x8, scoped, tag = 'scoped memory for forward.1']
    #allocation5 [shape = 'u8[65536]{0}', space=vmem, size = 0x10000, scoped, tag = 'input window, operand 1, single buffered']
    #allocation6 [shape = 's32[1]{0}', space=sflag, size = 0x4, scoped, tag = 'scoped memory for forward.1']
    #allocation7 [shape = 'u8[512]{0}', space=vmem, size = 0x400, scoped, tag = 'input window, operand 2, single buffered']
    #allocation8 [shape = 'u8[32768]{0}', space=vmem, size = 0x8000, scoped, tag = 'input window, operand 3, single buffered']
    #allocation9 [shape = 's32[1]{0}', space=sflag, size = 0x4, scoped, tag = 'scoped memory for forward.1']
    #allocation10 [shape = 'u8[32768]{0}', space=vmem, size = 0x8000, scoped, tag = 'input window, operand 5, single buffered']
    #allocation11 [shape = 'u8[65536]{0}', space=vmem, size = 0x10000, scoped, tag = 'input window, operand 7, single buffered']
    #allocation12 [shape = 's32[1]{0}', space=sflag, size = 0x4, scoped, tag = 'scoped memory for forward.1']
    #allocation13 [shape = 'u8[262144]{0}', space=vmem, size = 0x40000, scoped, tag = 'output window, operand 1']
    %16 = vsyncpa [#allocation3], 0
    %s17 = scalar_lea.sflag [#allocation3], 1
    %18 = vsyncpa %s17, 0
    %19 = vsyncpa [#allocation6], 0
    %20 = vsyncpa [#allocation9], 0
    %21 = vsyncpa [#allocation12], 0
    %22 = vsyncpa [#allocation4], 0
    %s23 = scalar_lea.sflag [#allocation4], 1
    %24 = vsyncpa %s23, 0
    loop: start=0, step=1, limit=4
    $region2: #{forward.1} parent=1 // loop_pre_header
      _
    $region3: #{forward.1} parent=1 // loop_header
      %s26 = sphi 0, %s30
      %p27 = scmp.ge.s32.totalorder %s26, 4
      %s36 = sphi 0, %s38
      %s39 = sphi 0, %s36
      %s40 = sphi 0, %s39
      %s56 = sphi 0, %s40
      %s60 = sphi 0, %s60
      %s62 = sphi 0, %s60
      %s63 = sphi 0, %s62
      %s77 = sphi 0, %s63
      %s81 = sphi 0, %s81
      %s83 = sphi 0, %s81
      %s84 = sphi 0, %s83
      %s98 = sphi 0, %s84
      %s102 = sphi 0, %s102
      %s104 = sphi 0, %s102
      %s105 = sphi 0, %s104
      %s119 = sphi 0, %s105
      %s123 = sphi 0, %s123
      %s125 = sphi 0, %s123
      %s126 = sphi 0, %s125
      %s140 = sphi 0, %s126
      %s144 = sphi 0, %s144
      %s146 = sphi 0, %s144
      %s147 = sphi 0, %s146
      %s161 = sphi 0, %s147
      %s165 = sphi 0, %s165
      %s167 = sphi 0, %s165
      %s168 = sphi 0, %s167
      %s182 = sphi 0, %s168
      %s186 = sphi 0, %s186
      %s188 = sphi 0, %s186
      %s189 = sphi 0, %s188
      %s203 = sphi 0, %s189
      %s207 = sphi 0, %s207
      %s209 = sphi 0, %s207
      %s210 = sphi 0, %s209
      %s224 = sphi 0, %s210
      %s230 = sphi 0, %s232
      %s233 = sphi 0, %s230
      %s234 = sphi 0, %s233
      %s250 = sphi 0, %s234
      %s256 = sphi 0, %s258
      %s259 = sphi 0, %s256
      %s260 = sphi 0, %s259
      %s276 = sphi 0, %s260
    $region4: #{forward.1} parent=1 // loop_header_branch
      %29 = sbr.rel (%p27) target = $region8
    $region5: #{forward.1} parent=1 // loop_body
      %s31 = ssub.s32 %s26, 1
      %s32 = ssub.s32 %s26, 2
      %s33 = sadd.s32 %s26, 1
      %s34 = ssub.s32 %s26, %s33
      %p35 = scmp.eq.s32.totalorder %s34, 0
      %s37 = sadd.s32 %s36, 1
      %s38 = scalar_select %p35, %s36, %s37
      %p41 = pneg %p35
      %p42 = scmp.eq.s32.totalorder %s26, 1
      %p43 = por %p41, %p42
      %p44 = scmp.ne.s32.totalorder %s36, %s39
      %p45 = scmp.eq.s32.totalorder %s26, 0
      %p46 = por %p44, %p45
      %p47 = scmp.ne.s32.totalorder %s36, %s39
      %p48 = scmp.eq.s32.totalorder %s31, 1
      %p49 = por %p47, %p48
      %p50 = scmp.ne.s32.totalorder %s39, %s40
      %p51 = scmp.eq.s32.totalorder %s31, 0
      %p52 = por %p50, %p51
      %p53 = scmp.ne.s32.totalorder %s39, %s40
      %p54 = scmp.eq.s32.totalorder %s32, 1
      %p55 = por %p53, %p54
      %p57 = scmp.ne.s32.totalorder %s40, %s56
      %p58 = scmp.eq.s32.totalorder %s32, 0
      %p59 = por %p57, %p58
      %s61 = sadd.s32 %s60, 1
      %p64 = scmp.eq.s32.totalorder %s26, 1
      %p65 = scmp.ne.s32.totalorder %s60, %s62
      %p66 = scmp.eq.s32.totalorder %s26, 0
      %p67 = por %p65, %p66
      %p68 = scmp.ne.s32.totalorder %s60, %s62
      %p69 = scmp.eq.s32.totalorder %s31, 1
      %p70 = por %p68, %p69
      %p71 = scmp.ne.s32.totalorder %s62, %s63
      %p72 = scmp.eq.s32.totalorder %s31, 0
      %p73 = por %p71, %p72
      %p74 = scmp.ne.s32.totalorder %s62, %s63
      %p75 = scmp.eq.s32.totalorder %s32, 1
      %p76 = por %p74, %p75
      %p78 = scmp.ne.s32.totalorder %s63, %s77
      %p79 = scmp.eq.s32.totalorder %s32, 0
      %p80 = por %p78, %p79
      %s82 = sadd.s32 %s81, 1
      %p85 = scmp.eq.s32.totalorder %s26, 1
      %p86 = scmp.ne.s32.totalorder %s81, %s83
      %p87 = scmp.eq.s32.totalorder %s26, 0
      %p88 = por %p86, %p87
      %p89 = scmp.ne.s32.totalorder %s81, %s83
      %p90 = scmp.eq.s32.totalorder %s31, 1
      %p91 = por %p89, %p90
      %p92 = scmp.ne.s32.totalorder %s83, %s84
      %p93 = scmp.eq.s32.totalorder %s31, 0
      %p94 = por %p92, %p93
      %p95 = scmp.ne.s32.totalorder %s83, %s84
      %p96 = scmp.eq.s32.totalorder %s32, 1
      %p97 = por %p95, %p96
      %p99 = scmp.ne.s32.totalorder %s84, %s98
      %p100 = scmp.eq.s32.totalorder %s32, 0
      %p101 = por %p99, %p100
      %s103 = sadd.s32 %s102, 1
      %p106 = scmp.eq.s32.totalorder %s26, 1
      %p107 = scmp.ne.s32.totalorder %s102, %s104
      %p108 = scmp.eq.s32.totalorder %s26, 0
      %p109 = por %p107, %p108
      %p110 = scmp.ne.s32.totalorder %s102, %s104
      %p111 = scmp.eq.s32.totalorder %s31, 1
      %p112 = por %p110, %p111
      %p113 = scmp.ne.s32.totalorder %s104, %s105
      %p114 = scmp.eq.s32.totalorder %s31, 0
      %p115 = por %p113, %p114
      %p116 = scmp.ne.s32.totalorder %s104, %s105
      %p117 = scmp.eq.s32.totalorder %s32, 1
      %p118 = por %p116, %p117
      %p120 = scmp.ne.s32.totalorder %s105, %s119
      %p121 = scmp.eq.s32.totalorder %s32, 0
      %p122 = por %p120, %p121
      %s124 = sadd.s32 %s123, 1
      %p127 = scmp.eq.s32.totalorder %s26, 1
      %p128 = scmp.ne.s32.totalorder %s123, %s125
      %p129 = scmp.eq.s32.totalorder %s26, 0
      %p130 = por %p128, %p129
      %p131 = scmp.ne.s32.totalorder %s123, %s125
      %p132 = scmp.eq.s32.totalorder %s31, 1
      %p133 = por %p131, %p132
      %p134 = scmp.ne.s32.totalorder %s125, %s126
      %p135 = scmp.eq.s32.totalorder %s31, 0
      %p136 = por %p134, %p135
      %p137 = scmp.ne.s32.totalorder %s125, %s126
      %p138 = scmp.eq.s32.totalorder %s32, 1
      %p139 = por %p137, %p138
      %p141 = scmp.ne.s32.totalorder %s126, %s140
      %p142 = scmp.eq.s32.totalorder %s32, 0
      %p143 = por %p141, %p142
      %s145 = sadd.s32 %s144, 1
      %p148 = scmp.eq.s32.totalorder %s26, 1
      %p149 = scmp.ne.s32.totalorder %s144, %s146
      %p150 = scmp.eq.s32.totalorder %s26, 0
      %p151 = por %p149, %p150
      %p152 = scmp.ne.s32.totalorder %s144, %s146
      %p153 = scmp.eq.s32.totalorder %s31, 1
      %p154 = por %p152, %p153
      %p155 = scmp.ne.s32.totalorder %s146, %s147
      %p156 = scmp.eq.s32.totalorder %s31, 0
      %p157 = por %p155, %p156
      %p158 = scmp.ne.s32.totalorder %s146, %s147
      %p159 = scmp.eq.s32.totalorder %s32, 1
      %p160 = por %p158, %p159
      %p162 = scmp.ne.s32.totalorder %s147, %s161
      %p163 = scmp.eq.s32.totalorder %s32, 0
      %p164 = por %p162, %p163
      %s166 = sadd.s32 %s165, 1
      %p169 = scmp.eq.s32.totalorder %s26, 1
      %p170 = scmp.ne.s32.totalorder %s165, %s167
      %p171 = scmp.eq.s32.totalorder %s26, 0
      %p172 = por %p170, %p171
      %p173 = scmp.ne.s32.totalorder %s165, %s167
      %p174 = scmp.eq.s32.totalorder %s31, 1
      %p175 = por %p173, %p174
      %p176 = scmp.ne.s32.totalorder %s167, %s168
      %p177 = scmp.eq.s32.totalorder %s31, 0
      %p178 = por %p176, %p177
      %p179 = scmp.ne.s32.totalorder %s167, %s168
      %p180 = scmp.eq.s32.totalorder %s32, 1
      %p181 = por %p179, %p180
      %p183 = scmp.ne.s32.totalorder %s168, %s182
      %p184 = scmp.eq.s32.totalorder %s32, 0
      %p185 = por %p183, %p184
      %s187 = sadd.s32 %s186, 1
      %p190 = scmp.eq.s32.totalorder %s26, 1
      %p191 = scmp.ne.s32.totalorder %s186, %s188
      %p192 = scmp.eq.s32.totalorder %s26, 0
      %p193 = por %p191, %p192
      %p194 = scmp.ne.s32.totalorder %s186, %s188
      %p195 = scmp.eq.s32.totalorder %s31, 1
      %p196 = por %p194, %p195
      %p197 = scmp.ne.s32.totalorder %s188, %s189
      %p198 = scmp.eq.s32.totalorder %s31, 0
      %p199 = por %p197, %p198
      %p200 = scmp.ne.s32.totalorder %s188, %s189
      %p201 = scmp.eq.s32.totalorder %s32, 1
      %p202 = por %p200, %p201
      %p204 = scmp.ne.s32.totalorder %s189, %s203
      %p205 = scmp.eq.s32.totalorder %s32, 0
      %p206 = por %p204, %p205
      %s208 = sadd.s32 %s207, 1
      %p211 = scmp.eq.s32.totalorder %s26, 1
      %p212 = scmp.ne.s32.totalorder %s207, %s209
      %p213 = scmp.eq.s32.totalorder %s26, 0
      %p214 = por %p212, %p213
      %p215 = scmp.ne.s32.totalorder %s207, %s209
      %p216 = scmp.eq.s32.totalorder %s31, 1
      %p217 = por %p215, %p216
      %p218 = scmp.ne.s32.totalorder %s209, %s210
      %p219 = scmp.eq.s32.totalorder %s31, 0
      %p220 = por %p218, %p219
      %p221 = scmp.ne.s32.totalorder %s209, %s210
      %p222 = scmp.eq.s32.totalorder %s32, 1
      %p223 = por %p221, %p222
      %p225 = scmp.ne.s32.totalorder %s210, %s224
      %p226 = scmp.eq.s32.totalorder %s32, 0
      %p227 = por %p225, %p226
      %s228 = ssub.s32 %s26, %s33
      %p229 = scmp.eq.s32.totalorder %s228, 0
      %s231 = sadd.s32 %s230, 1
      %s232 = scalar_select %p229, %s230, %s231
      %p235 = pneg %p229
      %p236 = scmp.eq.s32.totalorder %s26, 1
      %p237 = por %p235, %p236
      %p238 = scmp.ne.s32.totalorder %s230, %s233
      %p239 = scmp.eq.s32.totalorder %s26, 0
      %p240 = por %p238, %p239
      %p241 = scmp.ne.s32.totalorder %s230, %s233
      %p242 = scmp.eq.s32.totalorder %s31, 1
      %p243 = por %p241, %p242
      %p244 = scmp.ne.s32.totalorder %s233, %s234
      %p245 = scmp.eq.s32.totalorder %s31, 0
      %p246 = por %p244, %p245
      %p247 = scmp.ne.s32.totalorder %s233, %s234
      %p248 = scmp.eq.s32.totalorder %s32, 1
      %p249 = por %p247, %p248
      %p251 = scmp.ne.s32.totalorder %s234, %s250
      %p252 = scmp.eq.s32.totalorder %s32, 0
      %p253 = por %p251, %p252
      %s254 = ssub.s32 %s26, %s33
      %p255 = scmp.eq.s32.totalorder %s254, 0
      %s257 = sadd.s32 %s256, 1
      %s258 = scalar_select %p255, %s256, %s257
      %p261 = pneg %p255
      %p262 = scmp.eq.s32.totalorder %s26, 1
      %p263 = por %p261, %p262
      %p264 = scmp.ne.s32.totalorder %s256, %s259
      %p265 = scmp.eq.s32.totalorder %s26, 0
      %p266 = por %p264, %p265
      %p267 = scmp.ne.s32.totalorder %s256, %s259
      %p268 = scmp.eq.s32.totalorder %s31, 1
      %p269 = por %p267, %p268
      %p270 = scmp.ne.s32.totalorder %s259, %s260
      %p271 = scmp.eq.s32.totalorder %s31, 0
      %p272 = por %p270, %p271
      %p273 = scmp.ne.s32.totalorder %s259, %s260
      %p274 = scmp.eq.s32.totalorder %s32, 1
      %p275 = por %p273, %p274
      %p277 = scmp.ne.s32.totalorder %s260, %s276
      %p278 = scmp.eq.s32.totalorder %s32, 0
      %p279 = por %p277, %p278
      %p280 = scmp.le.s32.totalorder 1, %s26
      %p281 = scmp.lt.s32.totalorder %s26, 3
      %p282 = pnand %p280, %p281
      %p283 = pneg %p282
      // Predicated region
      $region9: #{forward.1} parent=5 // pred_check
        _
      $region10: #{forward.1} parent=5 // pred_check_branch
        %285 = sbr.rel (%p282) target = $region12
      $region11: #{forward.1} parent=5 // pred_region
        %s286 = ssub.s32 %s26, 1
        // Predicated region
        $region13: #{forward.1} parent=11 // pred_check
          %p287 = pneg %p73
        $region14: #{forward.1} parent=11 // pred_check_branch
          %289 = sbr.rel (%p287) target = $region16
        $region15: #{forward.1} parent=11 // pred_region
          %s291 = ssub.s32 2048, 2048
          %292 = vsyncadd [#allocation6], %s291
          %s293 = sshll.u32 [#allocation5], 4
          %s294 = int_to_ptr.vmem [resolvable:$true] %s293
          %299 = dma.hbm_to_vmem [thread:$0]  %s1, 2048, %s294, [#allocation6], 64, 64, 4
        $region16: #{forward.1} parent=11 // pred_fallthru
          _
        // Predicated region
        $region17: #{forward.1} parent=11 // pred_check
          %p300 = pneg %p94
        $region18: #{forward.1} parent=11 // pred_check_branch
          %302 = sbr.rel (%p300) target = $region20
        $region19: #{forward.1} parent=11 // pred_region
          %s304 = ssub.s32 16, 16
          %305 = vsyncadd [#allocation6], %s304
          %s307 = sshll.u32 [#allocation7], 4
          %s308 = int_to_ptr.vmem [resolvable:$true] %s307
          %310 = dma.hbm_to_vmem [thread:$0]  %s2, 16, %s308, [#allocation6]
        $region20: #{forward.1} parent=11 // pred_fallthru
          _
        // Predicated region
        $region21: #{forward.1} parent=11 // pred_check
          %p311 = pneg %p115
        $region22: #{forward.1} parent=11 // pred_check_branch
          %313 = sbr.rel (%p311) target = $region24
        $region23: #{forward.1} parent=11 // pred_region
          %s315 = ssub.s32 1024, 1024
          %316 = vsyncadd [#allocation9], %s315
          %s317 = sshll.u32 [#allocation8], 4
          %s318 = int_to_ptr.vmem [resolvable:$true] %s317
          %323 = dma.hbm_to_vmem [thread:$0]  %s3, 1024, %s318, [#allocation9], 64, 64, 4
        $region24: #{forward.1} parent=11 // pred_fallthru
          _
        // Predicated region
        $region25: #{forward.1} parent=11 // pred_check
          %p324 = pneg %p136
        $region26: #{forward.1} parent=11 // pred_check_branch
          %326 = sbr.rel (%p324) target = $region28
        $region27: #{forward.1} parent=11 // pred_region
          _
        $region28: #{forward.1} parent=11 // pred_fallthru
          _
        // Predicated region
        $region29: #{forward.1} parent=11 // pred_check
          %p327 = pneg %p157
        $region30: #{forward.1} parent=11 // pred_check_branch
          %329 = sbr.rel (%p327) target = $region32
        $region31: #{forward.1} parent=11 // pred_region
          %s331 = ssub.s32 1024, 1024
          %332 = vsyncadd [#allocation9], %s331
          %s333 = sshll.u32 [#allocation10], 4
          %s334 = int_to_ptr.vmem [resolvable:$true] %s333
          %339 = dma.hbm_to_vmem [thread:$0]  %s5, 1024, %s334, [#allocation9], 64, 64, 4
        $region32: #{forward.1} parent=11 // pred_fallthru
          _
        // Predicated region
        $region33: #{forward.1} parent=11 // pred_check
          %p340 = pneg %p178
        $region34: #{forward.1} parent=11 // pred_check_branch
          %342 = sbr.rel (%p340) target = $region36
        $region35: #{forward.1} parent=11 // pred_region
          _
        $region36: #{forward.1} parent=11 // pred_fallthru
          _
        // Predicated region
        $region37: #{forward.1} parent=11 // pred_check
          %p343 = pneg %p199
        $region38: #{forward.1} parent=11 // pred_check_branch
          %345 = sbr.rel (%p343) target = $region40
        $region39: #{forward.1} parent=11 // pred_region
          %s347 = ssub.s32 2048, 2048
          %348 = vsyncadd [#allocation12], %s347
          %s349 = sshll.u32 [#allocation11], 4
          %s350 = int_to_ptr.vmem [resolvable:$true] %s349
          %355 = dma.hbm_to_vmem [thread:$0]  %s7, 2048, %s350, [#allocation12], 128, 128, 8
        $region40: #{forward.1} parent=11 // pred_fallthru
          _
        // Predicated region
        $region41: #{forward.1} parent=11 // pred_check
          %p356 = pneg %p220
        $region42: #{forward.1} parent=11 // pred_check_branch
          %358 = sbr.rel (%p356) target = $region44
        $region43: #{forward.1} parent=11 // pred_region
          _
        $region44: #{forward.1} parent=11 // pred_fallthru
          _
      $region12: #{forward.1} parent=5 // pred_fallthru
        _
      %p359 = scmp.lt.s32.totalorder %s26, 2
      // Predicated region
      $region45: #{forward.1} parent=5 // pred_check
        %p360 = pneg %p359
      $region46: #{forward.1} parent=5 // pred_check_branch
        %362 = sbr.rel (%p360) target = $region48
      $region47: #{forward.1} parent=5 // pred_region
        // Predicated region
        $region49: #{forward.1} parent=47 // pred_check
          %p363 = pneg %p46
        $region50: #{forward.1} parent=47 // pred_check_branch
          %365 = sbr.rel (%p363) target = $region52
        $region51: #{forward.1} parent=47 // pred_region
          %s366 = sand.u32 %s36, 1
          %s367 = scalar_lea.sflag [#allocation3], %s366
          %s368 = sand.u32 %s36, 1
          %s369 = smul.addr %s368, 512
          %s370 = scalar_lea.vmem [#allocation2], %s369
          %s371 = smul.u32 32, %s26
          %s373 = ssub.s32 8192, 8192
          %374 = vsyncadd %s367, %s373
          %s375 = smul.addr %s371, 2
          %s376 = smul.addr %s375, 128
          %s377 = scalar_lea.hbm %s0, %s376
          %s378 = sshll.u32 %s370, 4
          %s379 = int_to_ptr.vmem [resolvable:$true] %s378
          %384 = dma.hbm_to_vmem [thread:$0]  %s377, 8192, %s379, %s367, 256, 256, 16
        $region52: #{forward.1} parent=47 // pred_fallthru
          _
      $region48: #{forward.1} parent=5 // pred_fallthru
        _
      %p385 = scmp.le.s32.totalorder 1, %s26
      %p386 = scmp.lt.s32.totalorder %s26, 3
      %p387 = pnand %p385, %p386
      %p388 = pneg %p387
      // Predicated region
      $region53: #{forward.1} parent=5 // pred_check
        _
      $region54: #{forward.1} parent=5 // pred_check_branch
        %390 = sbr.rel (%p387) target = $region56
      $region55: #{forward.1} parent=5 // pred_region
        %s391 = ssub.s32 %s26, 1
        %s392 = sand.u32 %s39, 1
        %s393 = scalar_lea.sflag [#allocation3], %s392
        %s394 = sand.u32 %s39, 1
        %s395 = smul.addr %s394, 512
        %s396 = scalar_lea.vmem [#allocation2], %s395
        // Predicated region
        $region57: #{forward.1} parent=55 // pred_check
          %p397 = pneg %p52
        $region58: #{forward.1} parent=55 // pred_check_branch
          %399 = sbr.rel (%p397) target = $region60
        $region59: #{forward.1} parent=55 // pred_region
          %400 = dma.done %s393, 8192
        $region60: #{forward.1} parent=55 // pred_fallthru
          _
        // Predicated region
        $region61: #{forward.1} parent=55 // pred_check
          %p401 = pneg %p73
        $region62: #{forward.1} parent=55 // pred_check_branch
          %403 = sbr.rel (%p401) target = $region64
        $region63: #{forward.1} parent=55 // pred_region
          %404 = dma.done [#allocation6], 2048
        $region64: #{forward.1} parent=55 // pred_fallthru
          _
        // Predicated region
        $region65: #{forward.1} parent=55 // pred_check
          %p405 = pneg %p94
        $region66: #{forward.1} parent=55 // pred_check_branch
          %407 = sbr.rel (%p405) target = $region68
        $region67: #{forward.1} parent=55 // pred_region
          %408 = dma.done [#allocation6], 16
        $region68: #{forward.1} parent=55 // pred_fallthru
          _
        // Predicated region
        $region69: #{forward.1} parent=55 // pred_check
          %p409 = pneg %p115
        $region70: #{forward.1} parent=55 // pred_check_branch
          %411 = sbr.rel (%p409) target = $region72
        $region71: #{forward.1} parent=55 // pred_region
          %412 = dma.done [#allocation9], 1024
        $region72: #{forward.1} parent=55 // pred_fallthru
          _
        // Predicated region
        $region73: #{forward.1} parent=55 // pred_check
          %p413 = pneg %p157
        $region74: #{forward.1} parent=55 // pred_check_branch
          %415 = sbr.rel (%p413) target = $region76
        $region75: #{forward.1} parent=55 // pred_region
          %416 = dma.done [#allocation9], 1024
        $region76: #{forward.1} parent=55 // pred_fallthru
          _
        // Predicated region
        $region77: #{forward.1} parent=55 // pred_check
          %p417 = pneg %p199
        $region78: #{forward.1} parent=55 // pred_check_branch
          %419 = sbr.rel (%p417) target = $region80
        $region79: #{forward.1} parent=55 // pred_region
          %420 = dma.done [#allocation12], 2048
        $region80: #{forward.1} parent=55 // pred_fallthru
          _
        %s421 = sand.u32 %s39, 1
        %s422 = scalar_lea.sflag [#allocation3], %s421
        %s423 = sand.u32 %s39, 1
        %s424 = smul.addr %s423, 512
        %s425 = scalar_lea.vmem [#allocation2], %s424
        %p426 = pneg %p52
        %p427 = pneg %p49
        %p428 = pneg %p73
        %p429 = pneg %p70
        %p430 = pneg %p94
        %p431 = pneg %p91
        %p432 = pneg %p115
        %p433 = pneg %p112
        %p434 = pneg %p136
        %p435 = pneg %p133
        %p436 = pneg %p157
        %p437 = pneg %p154
        %p438 = pneg %p178
        %p439 = pneg %p175
        %p440 = pneg %p199
        %p441 = pneg %p196
        %p442 = pneg %p220
        %p443 = pneg %p217
        %p444 = pneg %p246
        %p445 = pneg %p243
        %s446 = smul.u32 32, %s31
        %p447 = scmp.lt.s32.totalorder %s446, 63
        %s448 = scalar_select %p447, %s446, 63
        %s449 = smul.addr %s448, 4
        %s450 = scalar_lea.vmem %s9, %s449
        %p451 = pneg %p272
        %p452 = pneg %p269
        %s453 = sand.u32 %s259, 1
        %s454 = scalar_lea.sflag [#allocation4], %s453
        %s455 = sand.u32 %s259, 1
        %s456 = smul.addr %s455, 256
        %s457 = scalar_lea.vmem [#allocation13], %s456
        %s458 = smul.u32 32, %s31
        %s459 = smul.u32 32, %s31
        %p460 = scmp.lt.s32.totalorder %s459, 63
        %s461 = scalar_select %p460, %s459, 63
        %s462 = smul.addr %s461, 4
        %s463 = scalar_lea.vmem %s9, %s462
        %s464 = smul.u32 32, %s31
        %s465 = smul.u32 32, %s31
        %v467 = vld [vmem:[%s396] sm:$0xff]
        %v468 = vld [vmem:[%s396 + $0x8] sm:$0xff]
        %v469 = vld [vmem:[%s396 + $0x10] sm:$0xff]
        %v470 = vld [vmem:[%s396 + $0x18] sm:$0xff]
        %v471 = vld [vmem:[%s396 + $0x20] sm:$0xff]
        %v472 = vld [vmem:[%s396 + $0x28] sm:$0xff]
        %v473 = vld [vmem:[%s396 + $0x30] sm:$0xff]
        %v474 = vld [vmem:[%s396 + $0x38] sm:$0xff]
        %v475 = vld [vmem:[%s396 + $0x40] sm:$0xff]
        %v476 = vld [vmem:[%s396 + $0x48] sm:$0xff]
        %v477 = vld [vmem:[%s396 + $0x50] sm:$0xff]
        %v478 = vld [vmem:[%s396 + $0x58] sm:$0xff]
        %v479 = vld [vmem:[%s396 + $0x60] sm:$0xff]
        %v480 = vld [vmem:[%s396 + $0x68] sm:$0xff]
        %v481 = vld [vmem:[%s396 + $0x70] sm:$0xff]
        %v482 = vld [vmem:[%s396 + $0x78] sm:$0xff]
        %v483 = vld [vmem:[%s396 + $0x80] sm:$0xff]
        %v484 = vld [vmem:[%s396 + $0x88] sm:$0xff]
        %v485 = vld [vmem:[%s396 + $0x90] sm:$0xff]
        %v486 = vld [vmem:[%s396 + $0x98] sm:$0xff]
        %v487 = vld [vmem:[%s396 + $0xa0] sm:$0xff]
        %v488 = vld [vmem:[%s396 + $0xa8] sm:$0xff]
        %v489 = vld [vmem:[%s396 + $0xb0] sm:$0xff]
        %v490 = vld [vmem:[%s396 + $0xb8] sm:$0xff]
        %v491 = vld [vmem:[%s396 + $0xc0] sm:$0xff]
        %v492 = vld [vmem:[%s396 + $0xc8] sm:$0xff]
        %v493 = vld [vmem:[%s396 + $0xd0] sm:$0xff]
        %v494 = vld [vmem:[%s396 + $0xd8] sm:$0xff]
        %v495 = vld [vmem:[%s396 + $0xe0] sm:$0xff]
        %v496 = vld [vmem:[%s396 + $0xe8] sm:$0xff]
        %v497 = vld [vmem:[%s396 + $0xf0] sm:$0xff]
        %v498 = vld [vmem:[%s396 + $0xf8] sm:$0xff]
        %v499 = vld [vmem:[%s396 + $0x100] sm:$0xff]
        %v500 = vld [vmem:[%s396 + $0x108] sm:$0xff]
        %v501 = vld [vmem:[%s396 + $0x110] sm:$0xff]
        %v502 = vld [vmem:[%s396 + $0x118] sm:$0xff]
        %v503 = vld [vmem:[%s396 + $0x120] sm:$0xff]
        %v504 = vld [vmem:[%s396 + $0x128] sm:$0xff]
        %v505 = vld [vmem:[%s396 + $0x130] sm:$0xff]
        %v506 = vld [vmem:[%s396 + $0x138] sm:$0xff]
        %v507 = vld [vmem:[%s396 + $0x140] sm:$0xff]
        %v508 = vld [vmem:[%s396 + $0x148] sm:$0xff]
        %v509 = vld [vmem:[%s396 + $0x150] sm:$0xff]
        %v510 = vld [vmem:[%s396 + $0x158] sm:$0xff]
        %v511 = vld [vmem:[%s396 + $0x160] sm:$0xff]
        %v512 = vld [vmem:[%s396 + $0x168] sm:$0xff]
        %v513 = vld [vmem:[%s396 + $0x170] sm:$0xff]
        %v514 = vld [vmem:[%s396 + $0x178] sm:$0xff]
        %v515 = vld [vmem:[%s396 + $0x180] sm:$0xff]
        %v516 = vld [vmem:[%s396 + $0x188] sm:$0xff]
        %v517 = vld [vmem:[%s396 + $0x190] sm:$0xff]
        %v518 = vld [vmem:[%s396 + $0x198] sm:$0xff]
        %v519 = vld [vmem:[%s396 + $0x1a0] sm:$0xff]
        %v520 = vld [vmem:[%s396 + $0x1a8] sm:$0xff]
        %v521 = vld [vmem:[%s396 + $0x1b0] sm:$0xff]
        %v522 = vld [vmem:[%s396 + $0x1b8] sm:$0xff]
        %v523 = vld [vmem:[%s396 + $0x1c0] sm:$0xff]
        %v524 = vld [vmem:[%s396 + $0x1c8] sm:$0xff]
        %v525 = vld [vmem:[%s396 + $0x1d0] sm:$0xff]
        %v526 = vld [vmem:[%s396 + $0x1d8] sm:$0xff]
        %v527 = vld [vmem:[%s396 + $0x1e0] sm:$0xff]
        %v528 = vld [vmem:[%s396 + $0x1e8] sm:$0xff]
        %v529 = vld [vmem:[%s396 + $0x1f0] sm:$0xff]
        %v530 = vld [vmem:[%s396 + $0x1f8] sm:$0xff]
        %v531 = vpack.c.bf16 %v469, %v467
        %v532 = vpack.c.bf16 %v470, %v468
        %v533 = vpack.c.bf16 %v473, %v471
        %v534 = vpack.c.bf16 %v474, %v472
        %v535 = vpack.c.bf16 %v477, %v475
        %v536 = vpack.c.bf16 %v478, %v476
        %v537 = vpack.c.bf16 %v481, %v479
        %v538 = vpack.c.bf16 %v482, %v480
        %v539 = vpack.c.bf16 %v485, %v483
        %v540 = vpack.c.bf16 %v486, %v484
        %v541 = vpack.c.bf16 %v489, %v487
        %v542 = vpack.c.bf16 %v490, %v488
        %v543 = vpack.c.bf16 %v493, %v491
        %v544 = vpack.c.bf16 %v494, %v492
        %v545 = vpack.c.bf16 %v497, %v495
        %v546 = vpack.c.bf16 %v498, %v496
        %v547 = vpack.c.bf16 %v501, %v499
        %v548 = vpack.c.bf16 %v502, %v500
        %v549 = vpack.c.bf16 %v505, %v503
        %v550 = vpack.c.bf16 %v506, %v504
        %v551 = vpack.c.bf16 %v509, %v507
        %v552 = vpack.c.bf16 %v510, %v508
        %v553 = vpack.c.bf16 %v513, %v511
        %v554 = vpack.c.bf16 %v514, %v512
        %v555 = vpack.c.bf16 %v517, %v515
        %v556 = vpack.c.bf16 %v518, %v516
        %v557 = vpack.c.bf16 %v521, %v519
        %v558 = vpack.c.bf16 %v522, %v520
        %v559 = vpack.c.bf16 %v525, %v523
        %v560 = vpack.c.bf16 %v526, %v524
        %v561 = vpack.c.bf16 %v529, %v527
        %v562 = vpack.c.bf16 %v530, %v528
        %v563 = vld [vmem:[#allocation5] sm:$0xf]
        %v564 = vld [vmem:[#allocation5 + $0x4] sm:$0xf]
        %v565 = vld [vmem:[#allocation5 + $0x8] sm:$0xf]
        %v566 = vld [vmem:[#allocation5 + $0xc] sm:$0xf]
        %v567 = vld [vmem:[#allocation5 + $0x10] sm:$0xf]
        %v568 = vld [vmem:[#allocation5 + $0x14] sm:$0xf]
        %v569 = vld [vmem:[#allocation5 + $0x18] sm:$0xf]
        %v570 = vld [vmem:[#allocation5 + $0x1c] sm:$0xf]
        %v571 = vld [vmem:[#allocation5 + $0x20] sm:$0xf]
        %v572 = vld [vmem:[#allocation5 + $0x24] sm:$0xf]
        %v573 = vld [vmem:[#allocation5 + $0x28] sm:$0xf]
        %v574 = vld [vmem:[#allocation5 + $0x2c] sm:$0xf]
        %v575 = vld [vmem:[#allocation5 + $0x30] sm:$0xf]
        %v576 = vld [vmem:[#allocation5 + $0x34] sm:$0xf]
        %v577 = vld [vmem:[#allocation5 + $0x38] sm:$0xf]
        %v578 = vld [vmem:[#allocation5 + $0x3c] sm:$0xf]
        %v579 = vld [vmem:[#allocation5 + $0x40] sm:$0xf]
        %v580 = vld [vmem:[#allocation5 + $0x44] sm:$0xf]
        %v581 = vld [vmem:[#allocation5 + $0x48] sm:$0xf]
        %v582 = vld [vmem:[#allocation5 + $0x4c] sm:$0xf]
        %v583 = vld [vmem:[#allocation5 + $0x50] sm:$0xf]
        %v584 = vld [vmem:[#allocation5 + $0x54] sm:$0xf]
        %v585 = vld [vmem:[#allocation5 + $0x58] sm:$0xf]
        %v586 = vld [vmem:[#allocation5 + $0x5c] sm:$0xf]
        %v587 = vld [vmem:[#allocation5 + $0x60] sm:$0xf]
        %v588 = vld [vmem:[#allocation5 + $0x64] sm:$0xf]
        %v589 = vld [vmem:[#allocation5 + $0x68] sm:$0xf]
        %v590 = vld [vmem:[#allocation5 + $0x6c] sm:$0xf]
        %v591 = vld [vmem:[#allocation5 + $0x70] sm:$0xf]
        %v592 = vld [vmem:[#allocation5 + $0x74] sm:$0xf]
        %v593 = vld [vmem:[#allocation5 + $0x78] sm:$0xf]
        %v594 = vld [vmem:[#allocation5 + $0x7c] sm:$0xf]
        %v595 = vld [vmem:[#allocation7] sm:$0x1]
        %v597 = vlaneseq
        %v598 = vshrl.u32 %v597, 7
        %v599 = vsub.s32 0, %v598
        %v600 = vrot.slane %v595, %v599
        %v634 = vunpack.c.l.b16 %v563
        %v635 = vunpack.c.l.b16 %v564
        %v636 = vunpack.c.l.b16 %v565
        %v637 = vunpack.c.l.b16 %v566
        %v638 = vunpack.c.l.b16 %v567
        %v639 = vunpack.c.l.b16 %v568
        %v640 = vunpack.c.l.b16 %v569
        %v641 = vunpack.c.l.b16 %v570
        %v642 = vunpack.c.l.b16 %v571
        %v643 = vunpack.c.l.b16 %v572
        %v644 = vunpack.c.l.b16 %v573
        %v645 = vunpack.c.l.b16 %v574
        %v646 = vunpack.c.l.b16 %v575
        %v647 = vunpack.c.l.b16 %v576
        %v648 = vunpack.c.l.b16 %v577
        %v649 = vunpack.c.l.b16 %v578
        %v650 = vunpack.c.l.b16 %v579
        %v651 = vunpack.c.l.b16 %v580
        %v652 = vunpack.c.l.b16 %v581
        %v653 = vunpack.c.l.b16 %v582
        %v654 = vunpack.c.l.b16 %v583
        %v655 = vunpack.c.l.b16 %v584
        %v656 = vunpack.c.l.b16 %v585
        %v657 = vunpack.c.l.b16 %v586
        %v658 = vunpack.c.l.b16 %v587
        %v659 = vunpack.c.l.b16 %v588
        %v660 = vunpack.c.l.b16 %v589
        %v661 = vunpack.c.l.b16 %v590
        %v662 = vunpack.c.l.b16 %v591
        %v663 = vunpack.c.l.b16 %v592
        %v664 = vunpack.c.l.b16 %v593
        %v665 = vunpack.c.l.b16 %v594
        %v666 = vpack.c.b16 %v635, %v634
        %v667 = vpack.c.b16 %v637, %v636
        %v668 = vpack.c.b16 %v639, %v638
        %v669 = vpack.c.b16 %v641, %v640
        %v670 = vpack.c.b16 %v643, %v642
        %v671 = vpack.c.b16 %v645, %v644
        %v672 = vpack.c.b16 %v647, %v646
        %v673 = vpack.c.b16 %v649, %v648
        %v674 = vpack.c.b16 %v651, %v650
        %v675 = vpack.c.b16 %v653, %v652
        %v676 = vpack.c.b16 %v655, %v654
        %v677 = vpack.c.b16 %v657, %v656
        %v678 = vpack.c.b16 %v659, %v658
        %v679 = vpack.c.b16 %v661, %v660
        %v680 = vpack.c.b16 %v663, %v662
        %v681 = vpack.c.b16 %v665, %v664
        %698 = vmatprep.subr.bf16.mxu0 0
        %699 = vmatpush1.bf16.msra.mxu0 %v673
        %700 = vmatprep.subr.bf16.mxu0 0
        %701 = vmatpush1.bf16.msra.mxu0 %v672
        %702 = vmatprep.subr.bf16.mxu0 0
        %703 = vmatpush1.bf16.msra.mxu0 %v671
        %704 = vmatprep.subr.bf16.mxu0 0
        %705 = vmatpush1.bf16.msra.mxu0 %v670
        %706 = vmatprep.subr.bf16.mxu0 0
        %707 = vmatpush1.bf16.msra.mxu0 %v669
        %708 = vmatprep.subr.bf16.mxu0 0
        %709 = vmatpush1.bf16.msra.mxu0 %v668
        %710 = vmatprep.subr.bf16.mxu0 0
        %711 = vmatpush1.bf16.msra.mxu0 %v667
        %712 = vmatprep.subr.bf16.mxu0 0
        %713 = vmatpush1.bf16.msra.mxu0 %v666
        %714 = vmatprep.subr.bf16.mxu0 0
        %715 = vmatpush2.bf16.msra.mxu0 %v681
        %716 = vmatprep.subr.bf16.mxu0 0
        %717 = vmatpush2.bf16.msra.mxu0 %v680
        %718 = vmatprep.subr.bf16.mxu0 0
        %719 = vmatpush2.bf16.msra.mxu0 %v679
        %720 = vmatprep.subr.bf16.mxu0 0
        %721 = vmatpush2.bf16.msra.mxu0 %v678
        %722 = vmatprep.subr.bf16.mxu0 0
        %723 = vmatpush2.bf16.msra.mxu0 %v677
        %724 = vmatprep.subr.bf16.mxu0 0
        %725 = vmatpush2.bf16.msra.mxu0 %v676
        %726 = vmatprep.subr.bf16.mxu0 0
        %727 = vmatpush2.bf16.msra.mxu0 %v675
        %728 = vmatprep.subr.bf16.mxu0 0
        %729 = vmatpush2.bf16.msra.mxu0 %v674
        %730 = vmatprep.mubr.bf16.mxu0 %v532
        %731 = vmatmul.mubr.bf16.gmra.mxu0 %v531
        %v732 = vpop.f32.mrf.mxu0
        %v733 = vadd.f32 %v600, %v732
        %v734 = vpop.f32.mrf.mxu0
        %v735 = vpop.f32.mrf.mxu0
        %v736 = vadd.f32 %v600, %v735
        %v737 = vpop.f32.mrf.mxu0
        %738 = vmatprep.mubr.bf16.mxu0 %v534
        %739 = vmatmul.mubr.bf16.gmra.mxu0 %v533
        %v740 = vpop.f32.mrf.mxu0
        %v741 = vadd.f32 %v600, %v740
        %v742 = vpop.f32.mrf.mxu0
        %v743 = vpop.f32.mrf.mxu0
        %v744 = vadd.f32 %v600, %v743
        %v745 = vpop.f32.mrf.mxu0
        %746 = vmatprep.mubr.bf16.mxu0 %v536
        %747 = vmatmul.mubr.bf16.gmra.mxu0 %v535
        %v748 = vpop.f32.mrf.mxu0
        %v749 = vadd.f32 %v600, %v748
        %v750 = vpop.f32.mrf.mxu0
        %v751 = vpop.f32.mrf.mxu0
        %v752 = vadd.f32 %v600, %v751
        %v753 = vpop.f32.mrf.mxu0
        %754 = vmatprep.mubr.bf16.mxu0 %v538
        %755 = vmatmul.mubr.bf16.gmra.mxu0 %v537
        %v756 = vpop.f32.mrf.mxu0
        %v757 = vadd.f32 %v600, %v756
        %v758 = vpop.f32.mrf.mxu0
        %v759 = vpop.f32.mrf.mxu0
        %v760 = vadd.f32 %v600, %v759
        %v761 = vpop.f32.mrf.mxu0
        %762 = vmatprep.mubr.bf16.mxu0 %v540
        %763 = vmatmul.mubr.bf16.gmra.mxu0 %v539
        %v764 = vpop.f32.mrf.mxu0
        %v765 = vadd.f32 %v600, %v764
        %v766 = vpop.f32.mrf.mxu0
        %v767 = vpop.f32.mrf.mxu0
        %v768 = vadd.f32 %v600, %v767
        %v769 = vpop.f32.mrf.mxu0
        %770 = vmatprep.mubr.bf16.mxu0 %v542
        %771 = vmatmul.mubr.bf16.gmra.mxu0 %v541
        %v772 = vpop.f32.mrf.mxu0
        %v773 = vadd.f32 %v600, %v772
        %v774 = vpop.f32.mrf.mxu0
        %v775 = vpop.f32.mrf.mxu0
        %v776 = vadd.f32 %v600, %v775
        %v777 = vpop.f32.mrf.mxu0
        %778 = vmatprep.mubr.bf16.mxu0 %v544
        %779 = vmatmul.mubr.bf16.gmra.mxu0 %v543
        %v780 = vpop.f32.mrf.mxu0
        %v781 = vadd.f32 %v600, %v780
        %v782 = vpop.f32.mrf.mxu0
        %v783 = vpop.f32.mrf.mxu0
        %v784 = vadd.f32 %v600, %v783
        %v785 = vpop.f32.mrf.mxu0
        %786 = vmatprep.mubr.bf16.mxu0 %v546
        %787 = vmatmul.mubr.bf16.gmra.mxu0 %v545
        %v788 = vpop.f32.mrf.mxu0
        %v789 = vadd.f32 %v600, %v788
        %v790 = vpop.f32.mrf.mxu0
        %v791 = vpop.f32.mrf.mxu0
        %v792 = vadd.f32 %v600, %v791
        %v793 = vpop.f32.mrf.mxu0
        %794 = vmatprep.mubr.bf16.mxu0 %v548
        %795 = vmatmul.mubr.bf16.gmra.mxu0 %v547
        %v796 = vpop.f32.mrf.mxu0
        %v797 = vadd.f32 %v600, %v796
        %v798 = vpop.f32.mrf.mxu0
        %v799 = vpop.f32.mrf.mxu0
        %v800 = vadd.f32 %v600, %v799
        %v801 = vpop.f32.mrf.mxu0
        %802 = vmatprep.mubr.bf16.mxu0 %v550
        %803 = vmatmul.mubr.bf16.gmra.mxu0 %v549
        %v804 = vpop.f32.mrf.mxu0
        %v805 = vadd.f32 %v600, %v804
        %v806 = vpop.f32.mrf.mxu0
        %v807 = vpop.f32.mrf.mxu0
        %v808 = vadd.f32 %v600, %v807
        %v809 = vpop.f32.mrf.mxu0
        %810 = vmatprep.mubr.bf16.mxu0 %v552
        %811 = vmatmul.mubr.bf16.gmra.mxu0 %v551
        %v812 = vpop.f32.mrf.mxu0
        %v813 = vadd.f32 %v600, %v812
        %v814 = vpop.f32.mrf.mxu0
        %v815 = vpop.f32.mrf.mxu0
        %v816 = vadd.f32 %v600, %v815
        %v817 = vpop.f32.mrf.mxu0
        %818 = vmatprep.mubr.bf16.mxu0 %v554
        %819 = vmatmul.mubr.bf16.gmra.mxu0 %v553
        %v820 = vpop.f32.mrf.mxu0
        %v821 = vadd.f32 %v600, %v820
        %v822 = vpop.f32.mrf.mxu0
        %v823 = vpop.f32.mrf.mxu0
        %v824 = vadd.f32 %v600, %v823
        %v825 = vpop.f32.mrf.mxu0
        %826 = vmatprep.mubr.bf16.mxu0 %v556
        %827 = vmatmul.mubr.bf16.gmra.mxu0 %v555
        %v828 = vpop.f32.mrf.mxu0
        %v829 = vadd.f32 %v600, %v828
        %v830 = vpop.f32.mrf.mxu0
        %v831 = vpop.f32.mrf.mxu0
        %v832 = vadd.f32 %v600, %v831
        %v833 = vpop.f32.mrf.mxu0
        %834 = vmatprep.mubr.bf16.mxu0 %v558
        %835 = vmatmul.mubr.bf16.gmra.mxu0 %v557
        %v836 = vpop.f32.mrf.mxu0
        %v837 = vadd.f32 %v600, %v836
        %v838 = vpop.f32.mrf.mxu0
        %v839 = vpop.f32.mrf.mxu0
        %v840 = vadd.f32 %v600, %v839
        %v841 = vpop.f32.mrf.mxu0
        %842 = vmatprep.mubr.bf16.mxu0 %v560
        %843 = vmatmul.mubr.bf16.gmra.mxu0 %v559
        %v844 = vpop.f32.mrf.mxu0
        %v845 = vadd.f32 %v600, %v844
        %v846 = vpop.f32.mrf.mxu0
        %v847 = vpop.f32.mrf.mxu0
        %v848 = vadd.f32 %v600, %v847
        %v849 = vpop.f32.mrf.mxu0
        %850 = vmatprep.mubr.bf16.mxu0 %v562
        %851 = vmatmul.mubr.bf16.gmra.mxu0 %v561
        %v852 = vpop.f32.mrf.mxu0
        %v853 = vadd.f32 %v600, %v852
        %v854 = vpop.f32.mrf.mxu0
        %v855 = vpop.f32.mrf.mxu0
        %v856 = vadd.f32 %v600, %v855
        %v857 = vpop.f32.mrf.mxu0
        %858 = vdwg.mxu0
        %v859 = vmax.f32 %v733, 0.0
        %v860 = vmax.f32 %v736, 0.0
        %v861 = vmax.f32 %v741, 0.0
        %v862 = vmax.f32 %v744, 0.0
        %v863 = vmax.f32 %v749, 0.0
        %v864 = vmax.f32 %v752, 0.0
        %v865 = vmax.f32 %v757, 0.0
        %v866 = vmax.f32 %v760, 0.0
        %v867 = vmax.f32 %v765, 0.0
        %v868 = vmax.f32 %v768, 0.0
        %v869 = vmax.f32 %v773, 0.0
        %v870 = vmax.f32 %v776, 0.0
        %v871 = vmax.f32 %v781, 0.0
        %v872 = vmax.f32 %v784, 0.0
        %v873 = vmax.f32 %v789, 0.0
        %v874 = vmax.f32 %v792, 0.0
        %v875 = vmax.f32 %v797, 0.0
        %v876 = vmax.f32 %v800, 0.0
        %v877 = vmax.f32 %v805, 0.0
        %v878 = vmax.f32 %v808, 0.0
        %v879 = vmax.f32 %v813, 0.0
        %v880 = vmax.f32 %v816, 0.0
        %v881 = vmax.f32 %v821, 0.0
        %v882 = vmax.f32 %v824, 0.0
        %v883 = vmax.f32 %v829, 0.0
        %v884 = vmax.f32 %v832, 0.0
        %v885 = vmax.f32 %v837, 0.0
        %v886 = vmax.f32 %v840, 0.0
        %v887 = vmax.f32 %v845, 0.0
        %v888 = vmax.f32 %v848, 0.0
        %v889 = vmax.f32 %v853, 0.0
        %v890 = vmax.f32 %v856, 0.0
        %v891 = vpack.c.bf16 %v860, %v859
        %v892 = vpack.c.bf16 %v862, %v861
        %v893 = vpack.c.bf16 %v864, %v863
        %v894 = vpack.c.bf16 %v866, %v865
        %v895 = vpack.c.bf16 %v868, %v867
        %v896 = vpack.c.bf16 %v870, %v869
        %v897 = vpack.c.bf16 %v872, %v871
        %v898 = vpack.c.bf16 %v874, %v873
        %v899 = vpack.c.bf16 %v876, %v875
        %v900 = vpack.c.bf16 %v878, %v877
        %v901 = vpack.c.bf16 %v880, %v879
        %v902 = vpack.c.bf16 %v882, %v881
        %v903 = vpack.c.bf16 %v884, %v883
        %v904 = vpack.c.bf16 %v886, %v885
        %v905 = vpack.c.bf16 %v888, %v887
        %v906 = vpack.c.bf16 %v890, %v889
        %v907 = vld [vmem:[#allocation8] sm:$0xf]
        %v908 = vld [vmem:[#allocation8 + $0x4] sm:$0xf]
        %v909 = vld [vmem:[#allocation8 + $0x8] sm:$0xf]
        %v910 = vld [vmem:[#allocation8 + $0xc] sm:$0xf]
        %v911 = vld [vmem:[#allocation8 + $0x10] sm:$0xf]
        %v912 = vld [vmem:[#allocation8 + $0x14] sm:$0xf]
        %v913 = vld [vmem:[#allocation8 + $0x18] sm:$0xf]
        %v914 = vld [vmem:[#allocation8 + $0x1c] sm:$0xf]
        %v915 = vld [vmem:[#allocation8 + $0x20] sm:$0xf]
        %v916 = vld [vmem:[#allocation8 + $0x24] sm:$0xf]
        %v917 = vld [vmem:[#allocation8 + $0x28] sm:$0xf]
        %v918 = vld [vmem:[#allocation8 + $0x2c] sm:$0xf]
        %v919 = vld [vmem:[#allocation8 + $0x30] sm:$0xf]
        %v920 = vld [vmem:[#allocation8 + $0x34] sm:$0xf]
        %v921 = vld [vmem:[#allocation8 + $0x38] sm:$0xf]
        %v922 = vld [vmem:[#allocation8 + $0x3c] sm:$0xf]
        %v923 = vld [vmem:[%s4] sm:$0x1]
        %v925 = vlaneseq
        %v926 = vshrl.u32 %v925, 7
        %v927 = vsub.s32 0, %v926
        %v928 = vrot.slane %v923, %v927
        %v946 = vunpack.c.l.b16 %v907
        %v947 = vunpack.c.l.b16 %v908
        %v948 = vunpack.c.l.b16 %v909
        %v949 = vunpack.c.l.b16 %v910
        %v950 = vunpack.c.l.b16 %v911
        %v951 = vunpack.c.l.b16 %v912
        %v952 = vunpack.c.l.b16 %v913
        %v953 = vunpack.c.l.b16 %v914
        %v954 = vunpack.c.l.b16 %v915
        %v955 = vunpack.c.l.b16 %v916
        %v956 = vunpack.c.l.b16 %v917
        %v957 = vunpack.c.l.b16 %v918
        %v958 = vunpack.c.l.b16 %v919
        %v959 = vunpack.c.l.b16 %v920
        %v960 = vunpack.c.l.b16 %v921
        %v961 = vunpack.c.l.b16 %v922
        %v962 = vpack.c.b16 %v947, %v946
        %v963 = vpack.c.b16 %v949, %v948
        %v964 = vpack.c.b16 %v951, %v950
        %v965 = vpack.c.b16 %v953, %v952
        %v966 = vpack.c.b16 %v955, %v954
        %v967 = vpack.c.b16 %v957, %v956
        %v968 = vpack.c.b16 %v959, %v958
        %v969 = vpack.c.b16 %v961, %v960
        %978 = vmatprep.subr.bf16.mxu0 0
        %979 = vmatpush1.bf16.msra.mxu0 %v969
        %980 = vmatprep.subr.bf16.mxu0 0
        %981 = vmatpush1.bf16.msra.mxu0 %v968
        %982 = vmatprep.subr.bf16.mxu0 0
        %983 = vmatpush1.bf16.msra.mxu0 %v967
        %984 = vmatprep.subr.bf16.mxu0 0
        %985 = vmatpush1.bf16.msra.mxu0 %v966
        %986 = vmatprep.subr.bf16.mxu0 0
        %987 = vmatpush1.bf16.msra.mxu0 %v965
        %988 = vmatprep.subr.bf16.mxu0 0
        %989 = vmatpush1.bf16.msra.mxu0 %v964
        %990 = vmatprep.subr.bf16.mxu0 0
        %991 = vmatpush1.bf16.msra.mxu0 %v963
        %992 = vmatprep.subr.bf16.mxu0 0
        %993 = vmatpush1.bf16.msra.mxu0 %v962
        %994 = vmatprep.subr.bf16.mxu0 0
        %995 = vmatpush2.bf16.msra.mxu0 0
        %996 = vmatprep.subr.bf16.mxu0 0
        %997 = vmatpush2.bf16.msra.mxu0 0
        %998 = vmatprep.subr.bf16.mxu0 0
        %999 = vmatpush2.bf16.msra.mxu0 0
        %1000 = vmatprep.subr.bf16.mxu0 0
        %1001 = vmatpush2.bf16.msra.mxu0 0
        %1002 = vmatprep.subr.bf16.mxu0 0
        %1003 = vmatpush2.bf16.msra.mxu0 0
        %1004 = vmatprep.subr.bf16.mxu0 0
        %1005 = vmatpush2.bf16.msra.mxu0 0
        %1006 = vmatprep.subr.bf16.mxu0 0
        %1007 = vmatpush2.bf16.msra.mxu0 0
        %1008 = vmatprep.subr.bf16.mxu0 0
        %1009 = vmatpush2.bf16.msra.mxu0 0
        %1010 = vmatprep.mubr.bf16.mxu0 0
        %1011 = vmatmul.mubr.bf16.gmra.mxu0 %v891
        %v1012 = vpop.f32.mrf.mxu0
        %v1013 = vadd.f32 %v928, %v1012
        %v1014 = vpop.f32.mrf.mxu0
        %v1015 = vpop.f32.mrf.mxu0
        %v1016 = vadd.f32 %v928, %v1015
        %v1017 = vpop.f32.mrf.mxu0
        %1018 = vmatprep.mubr.bf16.mxu0 0
        %1019 = vmatmul.mubr.bf16.gmra.mxu0 %v892
        %v1020 = vpop.f32.mrf.mxu0
        %v1021 = vadd.f32 %v928, %v1020
        %v1022 = vpop.f32.mrf.mxu0
        %v1023 = vpop.f32.mrf.mxu0
        %v1024 = vadd.f32 %v928, %v1023
        %v1025 = vpop.f32.mrf.mxu0
        %1026 = vmatprep.mubr.bf16.mxu0 0
        %1027 = vmatmul.mubr.bf16.gmra.mxu0 %v893
        %v1028 = vpop.f32.mrf.mxu0
        %v1029 = vadd.f32 %v928, %v1028
        %v1030 = vpop.f32.mrf.mxu0
        %v1031 = vpop.f32.mrf.mxu0
        %v1032 = vadd.f32 %v928, %v1031
        %v1033 = vpop.f32.mrf.mxu0
        %1034 = vmatprep.mubr.bf16.mxu0 0
        %1035 = vmatmul.mubr.bf16.gmra.mxu0 %v894
        %v1036 = vpop.f32.mrf.mxu0
        %v1037 = vadd.f32 %v928, %v1036
        %v1038 = vpop.f32.mrf.mxu0
        %v1039 = vpop.f32.mrf.mxu0
        %v1040 = vadd.f32 %v928, %v1039
        %v1041 = vpop.f32.mrf.mxu0
        %1042 = vmatprep.mubr.bf16.mxu0 0
        %1043 = vmatmul.mubr.bf16.gmra.mxu0 %v895
        %v1044 = vpop.f32.mrf.mxu0
        %v1045 = vadd.f32 %v928, %v1044
        %v1046 = vpop.f32.mrf.mxu0
        %v1047 = vpop.f32.mrf.mxu0
        %v1048 = vadd.f32 %v928, %v1047
        %v1049 = vpop.f32.mrf.mxu0
        %1050 = vmatprep.mubr.bf16.mxu0 0
        %1051 = vmatmul.mubr.bf16.gmra.mxu0 %v896
        %v1052 = vpop.f32.mrf.mxu0
        %v1053 = vadd.f32 %v928, %v1052
        %v1054 = vpop.f32.mrf.mxu0
        %v1055 = vpop.f32.mrf.mxu0
        %v1056 = vadd.f32 %v928, %v1055
        %v1057 = vpop.f32.mrf.mxu0
        %1058 = vmatprep.mubr.bf16.mxu0 0
        %1059 = vmatmul.mubr.bf16.gmra.mxu0 %v897
        %v1060 = vpop.f32.mrf.mxu0
        %v1061 = vadd.f32 %v928, %v1060
        %v1062 = vpop.f32.mrf.mxu0
        %v1063 = vpop.f32.mrf.mxu0
        %v1064 = vadd.f32 %v928, %v1063
        %v1065 = vpop.f32.mrf.mxu0
        %1066 = vmatprep.mubr.bf16.mxu0 0
        %1067 = vmatmul.mubr.bf16.gmra.mxu0 %v898
        %v1068 = vpop.f32.mrf.mxu0
        %v1069 = vadd.f32 %v928, %v1068
        %v1070 = vpop.f32.mrf.mxu0
        %v1071 = vpop.f32.mrf.mxu0
        %v1072 = vadd.f32 %v928, %v1071
        %v1073 = vpop.f32.mrf.mxu0
        %1074 = vmatprep.mubr.bf16.mxu0 0
        %1075 = vmatmul.mubr.bf16.gmra.mxu0 %v899
        %v1076 = vpop.f32.mrf.mxu0
        %v1077 = vadd.f32 %v928, %v1076
        %v1078 = vpop.f32.mrf.mxu0
        %v1079 = vpop.f32.mrf.mxu0
        %v1080 = vadd.f32 %v928, %v1079
        %v1081 = vpop.f32.mrf.mxu0
        %1082 = vmatprep.mubr.bf16.mxu0 0
        %1083 = vmatmul.mubr.bf16.gmra.mxu0 %v900
        %v1084 = vpop.f32.mrf.mxu0
        %v1085 = vadd.f32 %v928, %v1084
        %v1086 = vpop.f32.mrf.mxu0
        %v1087 = vpop.f32.mrf.mxu0
        %v1088 = vadd.f32 %v928, %v1087
        %v1089 = vpop.f32.mrf.mxu0
        %1090 = vmatprep.mubr.bf16.mxu0 0
        %1091 = vmatmul.mubr.bf16.gmra.mxu0 %v901
        %v1092 = vpop.f32.mrf.mxu0
        %v1093 = vadd.f32 %v928, %v1092
        %v1094 = vpop.f32.mrf.mxu0
        %v1095 = vpop.f32.mrf.mxu0
        %v1096 = vadd.f32 %v928, %v1095
        %v1097 = vpop.f32.mrf.mxu0
        %1098 = vmatprep.mubr.bf16.mxu0 0
        %1099 = vmatmul.mubr.bf16.gmra.mxu0 %v902
        %v1100 = vpop.f32.mrf.mxu0
        %v1101 = vadd.f32 %v928, %v1100
        %v1102 = vpop.f32.mrf.mxu0
        %v1103 = vpop.f32.mrf.mxu0
        %v1104 = vadd.f32 %v928, %v1103
        %v1105 = vpop.f32.mrf.mxu0
        %1106 = vmatprep.mubr.bf16.mxu0 0
        %1107 = vmatmul.mubr.bf16.gmra.mxu0 %v903
        %v1108 = vpop.f32.mrf.mxu0
        %v1109 = vadd.f32 %v928, %v1108
        %v1110 = vpop.f32.mrf.mxu0
        %v1111 = vpop.f32.mrf.mxu0
        %v1112 = vadd.f32 %v928, %v1111
        %v1113 = vpop.f32.mrf.mxu0
        %1114 = vmatprep.mubr.bf16.mxu0 0
        %1115 = vmatmul.mubr.bf16.gmra.mxu0 %v904
        %v1116 = vpop.f32.mrf.mxu0
        %v1117 = vadd.f32 %v928, %v1116
        %v1118 = vpop.f32.mrf.mxu0
        %v1119 = vpop.f32.mrf.mxu0
        %v1120 = vadd.f32 %v928, %v1119
        %v1121 = vpop.f32.mrf.mxu0
        %1122 = vmatprep.mubr.bf16.mxu0 0
        %1123 = vmatmul.mubr.bf16.gmra.mxu0 %v905
        %v1124 = vpop.f32.mrf.mxu0
        %v1125 = vadd.f32 %v928, %v1124
        %v1126 = vpop.f32.mrf.mxu0
        %v1127 = vpop.f32.mrf.mxu0
        %v1128 = vadd.f32 %v928, %v1127
        %v1129 = vpop.f32.mrf.mxu0
        %1130 = vmatprep.mubr.bf16.mxu0 0
        %1131 = vmatmul.mubr.bf16.gmra.mxu0 %v906
        %v1132 = vpop.f32.mrf.mxu0
        %v1133 = vadd.f32 %v928, %v1132
        %v1134 = vpop.f32.mrf.mxu0
        %v1135 = vpop.f32.mrf.mxu0
        %v1136 = vadd.f32 %v928, %v1135
        %v1137 = vpop.f32.mrf.mxu0
        %1138 = vdwg.mxu0
        %v1139 = vmax.f32 %v1013, 0.0
        %v1140 = vmax.f32 %v1016, 0.0
        %v1141 = vmax.f32 %v1021, 0.0
        %v1142 = vmax.f32 %v1024, 0.0
        %v1143 = vmax.f32 %v1029, 0.0
        %v1144 = vmax.f32 %v1032, 0.0
        %v1145 = vmax.f32 %v1037, 0.0
        %v1146 = vmax.f32 %v1040, 0.0
        %v1147 = vmax.f32 %v1045, 0.0
        %v1148 = vmax.f32 %v1048, 0.0
        %v1149 = vmax.f32 %v1053, 0.0
        %v1150 = vmax.f32 %v1056, 0.0
        %v1151 = vmax.f32 %v1061, 0.0
        %v1152 = vmax.f32 %v1064, 0.0
        %v1153 = vmax.f32 %v1069, 0.0
        %v1154 = vmax.f32 %v1072, 0.0
        %v1155 = vmax.f32 %v1077, 0.0
        %v1156 = vmax.f32 %v1080, 0.0
        %v1157 = vmax.f32 %v1085, 0.0
        %v1158 = vmax.f32 %v1088, 0.0
        %v1159 = vmax.f32 %v1093, 0.0
        %v1160 = vmax.f32 %v1096, 0.0
        %v1161 = vmax.f32 %v1101, 0.0
        %v1162 = vmax.f32 %v1104, 0.0
        %v1163 = vmax.f32 %v1109, 0.0
        %v1164 = vmax.f32 %v1112, 0.0
        %v1165 = vmax.f32 %v1117, 0.0
        %v1166 = vmax.f32 %v1120, 0.0
        %v1167 = vmax.f32 %v1125, 0.0
        %v1168 = vmax.f32 %v1128, 0.0
        %v1169 = vmax.f32 %v1133, 0.0
        %v1170 = vmax.f32 %v1136, 0.0
        %v1171 = vpack.c.bf16 %v1140, %v1139
        %v1172 = vpack.c.bf16 %v1142, %v1141
        %v1173 = vpack.c.bf16 %v1144, %v1143
        %v1174 = vpack.c.bf16 %v1146, %v1145
        %v1175 = vpack.c.bf16 %v1148, %v1147
        %v1176 = vpack.c.bf16 %v1150, %v1149
        %v1177 = vpack.c.bf16 %v1152, %v1151
        %v1178 = vpack.c.bf16 %v1154, %v1153
        %v1179 = vpack.c.bf16 %v1156, %v1155
        %v1180 = vpack.c.bf16 %v1158, %v1157
        %v1181 = vpack.c.bf16 %v1160, %v1159
        %v1182 = vpack.c.bf16 %v1162, %v1161
        %v1183 = vpack.c.bf16 %v1164, %v1163
        %v1184 = vpack.c.bf16 %v1166, %v1165
        %v1185 = vpack.c.bf16 %v1168, %v1167
        %v1186 = vpack.c.bf16 %v1170, %v1169
        %v1203 = vunpack.c.l.b16 %v1171
        %v1204 = vunpack.c.h.b16 %v1171
        %v1205 = vunpack.c.l.b16 %v1172
        %v1206 = vunpack.c.h.b16 %v1172
        %v1207 = vunpack.c.l.b16 %v1173
        %v1208 = vunpack.c.h.b16 %v1173
        %v1209 = vunpack.c.l.b16 %v1174
        %v1210 = vunpack.c.h.b16 %v1174
        %v1211 = vunpack.c.l.b16 %v1175
        %v1212 = vunpack.c.h.b16 %v1175
        %v1213 = vunpack.c.l.b16 %v1176
        %v1214 = vunpack.c.h.b16 %v1176
        %v1215 = vunpack.c.l.b16 %v1177
        %v1216 = vunpack.c.h.b16 %v1177
        %v1217 = vunpack.c.l.b16 %v1178
        %v1218 = vunpack.c.h.b16 %v1178
        %v1219 = vunpack.c.l.b16 %v1179
        %v1220 = vunpack.c.h.b16 %v1179
        %v1221 = vunpack.c.l.b16 %v1180
        %v1222 = vunpack.c.h.b16 %v1180
        %v1223 = vunpack.c.l.b16 %v1181
        %v1224 = vunpack.c.h.b16 %v1181
        %v1225 = vunpack.c.l.b16 %v1182
        %v1226 = vunpack.c.h.b16 %v1182
        %v1227 = vunpack.c.l.b16 %v1183
        %v1228 = vunpack.c.h.b16 %v1183
        %v1229 = vunpack.c.l.b16 %v1184
        %v1230 = vunpack.c.h.b16 %v1184
        %v1231 = vunpack.c.l.b16 %v1185
        %v1232 = vunpack.c.h.b16 %v1185
        %v1233 = vunpack.c.l.b16 %v1186
        %v1234 = vunpack.c.h.b16 %v1186
        %v1235 = vpack.c.b16 %v1203, %v1203
        %v1236 = vpack.c.b16 %v1204, %v1204
        %v1237 = vpack.c.b16 %v1205, %v1205
        %v1238 = vpack.c.b16 %v1206, %v1206
        %v1239 = vpack.c.b16 %v1207, %v1207
        %v1240 = vpack.c.b16 %v1208, %v1208
        %v1241 = vpack.c.b16 %v1209, %v1209
        %v1242 = vpack.c.b16 %v1210, %v1210
        %v1243 = vpack.c.b16 %v1211, %v1211
        %v1244 = vpack.c.b16 %v1212, %v1212
        %v1245 = vpack.c.b16 %v1213, %v1213
        %v1246 = vpack.c.b16 %v1214, %v1214
        %v1247 = vpack.c.b16 %v1215, %v1215
        %v1248 = vpack.c.b16 %v1216, %v1216
        %v1249 = vpack.c.b16 %v1217, %v1217
        %v1250 = vpack.c.b16 %v1218, %v1218
        %v1251 = vpack.c.b16 %v1219, %v1219
        %v1252 = vpack.c.b16 %v1220, %v1220
        %v1253 = vpack.c.b16 %v1221, %v1221
        %v1254 = vpack.c.b16 %v1222, %v1222
        %v1255 = vpack.c.b16 %v1223, %v1223
        %v1256 = vpack.c.b16 %v1224, %v1224
        %v1257 = vpack.c.b16 %v1225, %v1225
        %v1258 = vpack.c.b16 %v1226, %v1226
        %v1259 = vpack.c.b16 %v1227, %v1227
        %v1260 = vpack.c.b16 %v1228, %v1228
        %v1261 = vpack.c.b16 %v1229, %v1229
        %v1262 = vpack.c.b16 %v1230, %v1230
        %v1263 = vpack.c.b16 %v1231, %v1231
        %v1264 = vpack.c.b16 %v1232, %v1232
        %v1265 = vpack.c.b16 %v1233, %v1233
        %v1266 = vpack.c.b16 %v1234, %v1234
        %vm1299 = vcmask 519168
        %1300 = vst.msk [vmem:[%s463] sm:$0xf] %vm1299, %v1235
        %1301 = vst.msk [vmem:[%s463 + $0x4] sm:$0xf] %vm1299, %v1236
        %1302 = vst.msk [vmem:[%s463 + $0x8] sm:$0xf] %vm1299, %v1237
        %1303 = vst.msk [vmem:[%s463 + $0xc] sm:$0xf] %vm1299, %v1238
        %1304 = vst.msk [vmem:[%s463 + $0x10] sm:$0xf] %vm1299, %v1239
        %1305 = vst.msk [vmem:[%s463 + $0x14] sm:$0xf] %vm1299, %v1240
        %1306 = vst.msk [vmem:[%s463 + $0x18] sm:$0xf] %vm1299, %v1241
        %1307 = vst.msk [vmem:[%s463 + $0x1c] sm:$0xf] %vm1299, %v1242
        %1308 = vst.msk [vmem:[%s463 + $0x20] sm:$0xf] %vm1299, %v1243
        %1309 = vst.msk [vmem:[%s463 + $0x24] sm:$0xf] %vm1299, %v1244
        %1310 = vst.msk [vmem:[%s463 + $0x28] sm:$0xf] %vm1299, %v1245
        %1311 = vst.msk [vmem:[%s463 + $0x2c] sm:$0xf] %vm1299, %v1246
        %1312 = vst.msk [vmem:[%s463 + $0x30] sm:$0xf] %vm1299, %v1247
        %1313 = vst.msk [vmem:[%s463 + $0x34] sm:$0xf] %vm1299, %v1248
        %1314 = vst.msk [vmem:[%s463 + $0x38] sm:$0xf] %vm1299, %v1249
        %1315 = vst.msk [vmem:[%s463 + $0x3c] sm:$0xf] %vm1299, %v1250
        %1316 = vst.msk [vmem:[%s463 + $0x40] sm:$0xf] %vm1299, %v1251
        %1317 = vst.msk [vmem:[%s463 + $0x44] sm:$0xf] %vm1299, %v1252
        %1318 = vst.msk [vmem:[%s463 + $0x48] sm:$0xf] %vm1299, %v1253
        %1319 = vst.msk [vmem:[%s463 + $0x4c] sm:$0xf] %vm1299, %v1254
        %1320 = vst.msk [vmem:[%s463 + $0x50] sm:$0xf] %vm1299, %v1255
        %1321 = vst.msk [vmem:[%s463 + $0x54] sm:$0xf] %vm1299, %v1256
        %1322 = vst.msk [vmem:[%s463 + $0x58] sm:$0xf] %vm1299, %v1257
        %1323 = vst.msk [vmem:[%s463 + $0x5c] sm:$0xf] %vm1299, %v1258
        %1324 = vst.msk [vmem:[%s463 + $0x60] sm:$0xf] %vm1299, %v1259
        %1325 = vst.msk [vmem:[%s463 + $0x64] sm:$0xf] %vm1299, %v1260
        %1326 = vst.msk [vmem:[%s463 + $0x68] sm:$0xf] %vm1299, %v1261
        %1327 = vst.msk [vmem:[%s463 + $0x6c] sm:$0xf] %vm1299, %v1262
        %1328 = vst.msk [vmem:[%s463 + $0x70] sm:$0xf] %vm1299, %v1263
        %1329 = vst.msk [vmem:[%s463 + $0x74] sm:$0xf] %vm1299, %v1264
        %1330 = vst.msk [vmem:[%s463 + $0x78] sm:$0xf] %vm1299, %v1265
        %1331 = vst.msk [vmem:[%s463 + $0x7c] sm:$0xf] %vm1299, %v1266
        %v1332 = vld [vmem:[#allocation10] sm:$0xf]
        %v1333 = vld [vmem:[#allocation10 + $0x4] sm:$0xf]
        %v1334 = vld [vmem:[#allocation10 + $0x8] sm:$0xf]
        %v1335 = vld [vmem:[#allocation10 + $0xc] sm:$0xf]
        %v1336 = vld [vmem:[#allocation10 + $0x10] sm:$0xf]
        %v1337 = vld [vmem:[#allocation10 + $0x14] sm:$0xf]
        %v1338 = vld [vmem:[#allocation10 + $0x18] sm:$0xf]
        %v1339 = vld [vmem:[#allocation10 + $0x1c] sm:$0xf]
        %v1340 = vld [vmem:[#allocation10 + $0x20] sm:$0xf]
        %v1341 = vld [vmem:[#allocation10 + $0x24] sm:$0xf]
        %v1342 = vld [vmem:[#allocation10 + $0x28] sm:$0xf]
        %v1343 = vld [vmem:[#allocation10 + $0x2c] sm:$0xf]
        %v1344 = vld [vmem:[#allocation10 + $0x30] sm:$0xf]
        %v1345 = vld [vmem:[#allocation10 + $0x34] sm:$0xf]
        %v1346 = vld [vmem:[#allocation10 + $0x38] sm:$0xf]
        %v1347 = vld [vmem:[#allocation10 + $0x3c] sm:$0xf]
        %v1348 = vld [vmem:[%s6] sm:$0x1]
        %v1350 = vlaneseq
        %v1351 = vshrl.u32 %v1350, 7
        %v1352 = vsub.s32 0, %v1351
        %v1353 = vrot.slane %v1348, %v1352
        %v1371 = vunpack.c.l.b16 %v1332
        %v1372 = vunpack.c.l.b16 %v1333
        %v1373 = vunpack.c.l.b16 %v1334
        %v1374 = vunpack.c.l.b16 %v1335
        %v1375 = vunpack.c.l.b16 %v1336
        %v1376 = vunpack.c.l.b16 %v1337
        %v1377 = vunpack.c.l.b16 %v1338
        %v1378 = vunpack.c.l.b16 %v1339
        %v1379 = vunpack.c.l.b16 %v1340
        %v1380 = vunpack.c.l.b16 %v1341
        %v1381 = vunpack.c.l.b16 %v1342
        %v1382 = vunpack.c.l.b16 %v1343
        %v1383 = vunpack.c.l.b16 %v1344
        %v1384 = vunpack.c.l.b16 %v1345
        %v1385 = vunpack.c.l.b16 %v1346
        %v1386 = vunpack.c.l.b16 %v1347
        %v1387 = vpack.c.b16 %v1372, %v1371
        %v1388 = vpack.c.b16 %v1374, %v1373
        %v1389 = vpack.c.b16 %v1376, %v1375
        %v1390 = vpack.c.b16 %v1378, %v1377
        %v1391 = vpack.c.b16 %v1380, %v1379
        %v1392 = vpack.c.b16 %v1382, %v1381
        %v1393 = vpack.c.b16 %v1384, %v1383
        %v1394 = vpack.c.b16 %v1386, %v1385
        %1403 = vmatprep.subr.bf16.mxu0 0
        %1404 = vmatpush1.bf16.msra.mxu0 %v1394
        %1405 = vmatprep.subr.bf16.mxu0 0
        %1406 = vmatpush1.bf16.msra.mxu0 %v1393
        %1407 = vmatprep.subr.bf16.mxu0 0
        %1408 = vmatpush1.bf16.msra.mxu0 %v1392
        %1409 = vmatprep.subr.bf16.mxu0 0
        %1410 = vmatpush1.bf16.msra.mxu0 %v1391
        %1411 = vmatprep.subr.bf16.mxu0 0
        %1412 = vmatpush1.bf16.msra.mxu0 %v1390
        %1413 = vmatprep.subr.bf16.mxu0 0
        %1414 = vmatpush1.bf16.msra.mxu0 %v1389
        %1415 = vmatprep.subr.bf16.mxu0 0
        %1416 = vmatpush1.bf16.msra.mxu0 %v1388
        %1417 = vmatprep.subr.bf16.mxu0 0
        %1418 = vmatpush1.bf16.msra.mxu0 %v1387
        %1419 = vmatprep.subr.bf16.mxu0 0
        %1420 = vmatpush2.bf16.msra.mxu0 0
        %1421 = vmatprep.subr.bf16.mxu0 0
        %1422 = vmatpush2.bf16.msra.mxu0 0
        %1423 = vmatprep.subr.bf16.mxu0 0
        %1424 = vmatpush2.bf16.msra.mxu0 0
        %1425 = vmatprep.subr.bf16.mxu0 0
        %1426 = vmatpush2.bf16.msra.mxu0 0
        %1427 = vmatprep.subr.bf16.mxu0 0
        %1428 = vmatpush2.bf16.msra.mxu0 0
        %1429 = vmatprep.subr.bf16.mxu0 0
        %1430 = vmatpush2.bf16.msra.mxu0 0
        %1431 = vmatprep.subr.bf16.mxu0 0
        %1432 = vmatpush2.bf16.msra.mxu0 0
        %1433 = vmatprep.subr.bf16.mxu0 0
        %1434 = vmatpush2.bf16.msra.mxu0 0
        %1435 = vmatprep.mubr.bf16.mxu0 0
        %1436 = vmatmul.mubr.bf16.gmra.mxu0 %v1171
        %v1437 = vpop.f32.mrf.mxu0
        %v1438 = vadd.f32 %v1353, %v1437
        %v1439 = vpop.f32.mrf.mxu0
        %v1440 = vpop.f32.mrf.mxu0
        %v1441 = vadd.f32 %v1353, %v1440
        %v1442 = vpop.f32.mrf.mxu0
        %1443 = vmatprep.mubr.bf16.mxu0 0
        %1444 = vmatmul.mubr.bf16.gmra.mxu0 %v1172
        %v1445 = vpop.f32.mrf.mxu0
        %v1446 = vadd.f32 %v1353, %v1445
        %v1447 = vpop.f32.mrf.mxu0
        %v1448 = vpop.f32.mrf.mxu0
        %v1449 = vadd.f32 %v1353, %v1448
        %v1450 = vpop.f32.mrf.mxu0
        %1451 = vmatprep.mubr.bf16.mxu0 0
        %1452 = vmatmul.mubr.bf16.gmra.mxu0 %v1173
        %v1453 = vpop.f32.mrf.mxu0
        %v1454 = vadd.f32 %v1353, %v1453
        %v1455 = vpop.f32.mrf.mxu0
        %v1456 = vpop.f32.mrf.mxu0
        %v1457 = vadd.f32 %v1353, %v1456
        %v1458 = vpop.f32.mrf.mxu0
        %1459 = vmatprep.mubr.bf16.mxu0 0
        %1460 = vmatmul.mubr.bf16.gmra.mxu0 %v1174
        %v1461 = vpop.f32.mrf.mxu0
        %v1462 = vadd.f32 %v1353, %v1461
        %v1463 = vpop.f32.mrf.mxu0
        %v1464 = vpop.f32.mrf.mxu0
        %v1465 = vadd.f32 %v1353, %v1464
        %v1466 = vpop.f32.mrf.mxu0
        %1467 = vmatprep.mubr.bf16.mxu0 0
        %1468 = vmatmul.mubr.bf16.gmra.mxu0 %v1175
        %v1469 = vpop.f32.mrf.mxu0
        %v1470 = vadd.f32 %v1353, %v1469
        %v1471 = vpop.f32.mrf.mxu0
        %v1472 = vpop.f32.mrf.mxu0
        %v1473 = vadd.f32 %v1353, %v1472
        %v1474 = vpop.f32.mrf.mxu0
        %1475 = vmatprep.mubr.bf16.mxu0 0
        %1476 = vmatmul.mubr.bf16.gmra.mxu0 %v1176
        %v1477 = vpop.f32.mrf.mxu0
        %v1478 = vadd.f32 %v1353, %v1477
        %v1479 = vpop.f32.mrf.mxu0
        %v1480 = vpop.f32.mrf.mxu0
        %v1481 = vadd.f32 %v1353, %v1480
        %v1482 = vpop.f32.mrf.mxu0
        %1483 = vmatprep.mubr.bf16.mxu0 0
        %1484 = vmatmul.mubr.bf16.gmra.mxu0 %v1177
        %v1485 = vpop.f32.mrf.mxu0
        %v1486 = vadd.f32 %v1353, %v1485
        %v1487 = vpop.f32.mrf.mxu0
        %v1488 = vpop.f32.mrf.mxu0
        %v1489 = vadd.f32 %v1353, %v1488
        %v1490 = vpop.f32.mrf.mxu0
        %1491 = vmatprep.mubr.bf16.mxu0 0
        %1492 = vmatmul.mubr.bf16.gmra.mxu0 %v1178
        %v1493 = vpop.f32.mrf.mxu0
        %v1494 = vadd.f32 %v1353, %v1493
        %v1495 = vpop.f32.mrf.mxu0
        %v1496 = vpop.f32.mrf.mxu0
        %v1497 = vadd.f32 %v1353, %v1496
        %v1498 = vpop.f32.mrf.mxu0
        %1499 = vmatprep.mubr.bf16.mxu0 0
        %1500 = vmatmul.mubr.bf16.gmra.mxu0 %v1179
        %v1501 = vpop.f32.mrf.mxu0
        %v1502 = vadd.f32 %v1353, %v1501
        %v1503 = vpop.f32.mrf.mxu0
        %v1504 = vpop.f32.mrf.mxu0
        %v1505 = vadd.f32 %v1353, %v1504
        %v1506 = vpop.f32.mrf.mxu0
        %1507 = vmatprep.mubr.bf16.mxu0 0
        %1508 = vmatmul.mubr.bf16.gmra.mxu0 %v1180
        %v1509 = vpop.f32.mrf.mxu0
        %v1510 = vadd.f32 %v1353, %v1509
        %v1511 = vpop.f32.mrf.mxu0
        %v1512 = vpop.f32.mrf.mxu0
        %v1513 = vadd.f32 %v1353, %v1512
        %v1514 = vpop.f32.mrf.mxu0
        %1515 = vmatprep.mubr.bf16.mxu0 0
        %1516 = vmatmul.mubr.bf16.gmra.mxu0 %v1181
        %v1517 = vpop.f32.mrf.mxu0
        %v1518 = vadd.f32 %v1353, %v1517
        %v1519 = vpop.f32.mrf.mxu0
        %v1520 = vpop.f32.mrf.mxu0
        %v1521 = vadd.f32 %v1353, %v1520
        %v1522 = vpop.f32.mrf.mxu0
        %1523 = vmatprep.mubr.bf16.mxu0 0
        %1524 = vmatmul.mubr.bf16.gmra.mxu0 %v1182
        %v1525 = vpop.f32.mrf.mxu0
        %v1526 = vadd.f32 %v1353, %v1525
        %v1527 = vpop.f32.mrf.mxu0
        %v1528 = vpop.f32.mrf.mxu0
        %v1529 = vadd.f32 %v1353, %v1528
        %v1530 = vpop.f32.mrf.mxu0
        %1531 = vmatprep.mubr.bf16.mxu0 0
        %1532 = vmatmul.mubr.bf16.gmra.mxu0 %v1183
        %v1533 = vpop.f32.mrf.mxu0
        %v1534 = vadd.f32 %v1353, %v1533
        %v1535 = vpop.f32.mrf.mxu0
        %v1536 = vpop.f32.mrf.mxu0
        %v1537 = vadd.f32 %v1353, %v1536
        %v1538 = vpop.f32.mrf.mxu0
        %1539 = vmatprep.mubr.bf16.mxu0 0
        %1540 = vmatmul.mubr.bf16.gmra.mxu0 %v1184
        %v1541 = vpop.f32.mrf.mxu0
        %v1542 = vadd.f32 %v1353, %v1541
        %v1543 = vpop.f32.mrf.mxu0
        %v1544 = vpop.f32.mrf.mxu0
        %v1545 = vadd.f32 %v1353, %v1544
        %v1546 = vpop.f32.mrf.mxu0
        %1547 = vmatprep.mubr.bf16.mxu0 0
        %1548 = vmatmul.mubr.bf16.gmra.mxu0 %v1185
        %v1549 = vpop.f32.mrf.mxu0
        %v1550 = vadd.f32 %v1353, %v1549
        %v1551 = vpop.f32.mrf.mxu0
        %v1552 = vpop.f32.mrf.mxu0
        %v1553 = vadd.f32 %v1353, %v1552
        %v1554 = vpop.f32.mrf.mxu0
        %1555 = vmatprep.mubr.bf16.mxu0 0
        %1556 = vmatmul.mubr.bf16.gmra.mxu0 %v1186
        %v1557 = vpop.f32.mrf.mxu0
        %v1558 = vadd.f32 %v1353, %v1557
        %v1559 = vpop.f32.mrf.mxu0
        %v1560 = vpop.f32.mrf.mxu0
        %v1561 = vadd.f32 %v1353, %v1560
        %v1562 = vpop.f32.mrf.mxu0
        %1563 = vdwg.mxu0
        %v1564 = vmax.f32 %v1438, 0.0
        %v1565 = vmax.f32 %v1441, 0.0
        %v1566 = vmax.f32 %v1446, 0.0
        %v1567 = vmax.f32 %v1449, 0.0
        %v1568 = vmax.f32 %v1454, 0.0
        %v1569 = vmax.f32 %v1457, 0.0
        %v1570 = vmax.f32 %v1462, 0.0
        %v1571 = vmax.f32 %v1465, 0.0
        %v1572 = vmax.f32 %v1470, 0.0
        %v1573 = vmax.f32 %v1473, 0.0
        %v1574 = vmax.f32 %v1478, 0.0
        %v1575 = vmax.f32 %v1481, 0.0
        %v1576 = vmax.f32 %v1486, 0.0
        %v1577 = vmax.f32 %v1489, 0.0
        %v1578 = vmax.f32 %v1494, 0.0
        %v1579 = vmax.f32 %v1497, 0.0
        %v1580 = vmax.f32 %v1502, 0.0
        %v1581 = vmax.f32 %v1505, 0.0
        %v1582 = vmax.f32 %v1510, 0.0
        %v1583 = vmax.f32 %v1513, 0.0
        %v1584 = vmax.f32 %v1518, 0.0
        %v1585 = vmax.f32 %v1521, 0.0
        %v1586 = vmax.f32 %v1526, 0.0
        %v1587 = vmax.f32 %v1529, 0.0
        %v1588 = vmax.f32 %v1534, 0.0
        %v1589 = vmax.f32 %v1537, 0.0
        %v1590 = vmax.f32 %v1542, 0.0
        %v1591 = vmax.f32 %v1545, 0.0
        %v1592 = vmax.f32 %v1550, 0.0
        %v1593 = vmax.f32 %v1553, 0.0
        %v1594 = vmax.f32 %v1558, 0.0
        %v1595 = vmax.f32 %v1561, 0.0
        %v1596 = vpack.c.bf16 %v1565, %v1564
        %v1597 = vpack.c.bf16 %v1567, %v1566
        %v1598 = vpack.c.bf16 %v1569, %v1568
        %v1599 = vpack.c.bf16 %v1571, %v1570
        %v1600 = vpack.c.bf16 %v1573, %v1572
        %v1601 = vpack.c.bf16 %v1575, %v1574
        %v1602 = vpack.c.bf16 %v1577, %v1576
        %v1603 = vpack.c.bf16 %v1579, %v1578
        %v1604 = vpack.c.bf16 %v1581, %v1580
        %v1605 = vpack.c.bf16 %v1583, %v1582
        %v1606 = vpack.c.bf16 %v1585, %v1584
        %v1607 = vpack.c.bf16 %v1587, %v1586
        %v1608 = vpack.c.bf16 %v1589, %v1588
        %v1609 = vpack.c.bf16 %v1591, %v1590
        %v1610 = vpack.c.bf16 %v1593, %v1592
        %v1611 = vpack.c.bf16 %v1595, %v1594
        %v1612 = vld [vmem:[#allocation11] sm:$0xff]
        %v1613 = vld [vmem:[#allocation11 + $0x8] sm:$0xff]
        %v1614 = vld [vmem:[#allocation11 + $0x10] sm:$0xff]
        %v1615 = vld [vmem:[#allocation11 + $0x18] sm:$0xff]
        %v1616 = vld [vmem:[#allocation11 + $0x20] sm:$0xff]
        %v1617 = vld [vmem:[#allocation11 + $0x28] sm:$0xff]
        %v1618 = vld [vmem:[#allocation11 + $0x30] sm:$0xff]
        %v1619 = vld [vmem:[#allocation11 + $0x38] sm:$0xff]
        %v1620 = vld [vmem:[#allocation11 + $0x40] sm:$0xff]
        %v1621 = vld [vmem:[#allocation11 + $0x48] sm:$0xff]
        %v1622 = vld [vmem:[#allocation11 + $0x50] sm:$0xff]
        %v1623 = vld [vmem:[#allocation11 + $0x58] sm:$0xff]
        %v1624 = vld [vmem:[#allocation11 + $0x60] sm:$0xff]
        %v1625 = vld [vmem:[#allocation11 + $0x68] sm:$0xff]
        %v1626 = vld [vmem:[#allocation11 + $0x70] sm:$0xff]
        %v1627 = vld [vmem:[#allocation11 + $0x78] sm:$0xff]
        %v1628 = vld [vmem:[%s8] sm:$0x3]
        %v1630 = vlaneseq
        %v1631 = vshrl.u32 %v1630, 7
        %v1632 = vsub.s32 0, %v1631
        %v1633 = vrot.slane %v1628, %v1632
        %v1634 = vlaneseq
        %v1635 = vshrl.u32 %v1634, 7
        %v1636 = vsub.s32 1, %v1635
        %v1637 = vrot.slane %v1628, %v1636
        %v1656 = vunpack.c.l.b16 %v1612
        %v1657 = vunpack.c.h.b16 %v1612
        %v1658 = vunpack.c.l.b16 %v1613
        %v1659 = vunpack.c.h.b16 %v1613
        %v1660 = vunpack.c.l.b16 %v1614
        %v1661 = vunpack.c.h.b16 %v1614
        %v1662 = vunpack.c.l.b16 %v1615
        %v1663 = vunpack.c.h.b16 %v1615
        %v1664 = vunpack.c.l.b16 %v1616
        %v1665 = vunpack.c.h.b16 %v1616
        %v1666 = vunpack.c.l.b16 %v1617
        %v1667 = vunpack.c.h.b16 %v1617
        %v1668 = vunpack.c.l.b16 %v1618
        %v1669 = vunpack.c.h.b16 %v1618
        %v1670 = vunpack.c.l.b16 %v1619
        %v1671 = vunpack.c.h.b16 %v1619
        %v1672 = vunpack.c.l.b16 %v1620
        %v1673 = vunpack.c.h.b16 %v1620
        %v1674 = vunpack.c.l.b16 %v1621
        %v1675 = vunpack.c.h.b16 %v1621
        %v1676 = vunpack.c.l.b16 %v1622
        %v1677 = vunpack.c.h.b16 %v1622
        %v1678 = vunpack.c.l.b16 %v1623
        %v1679 = vunpack.c.h.b16 %v1623
        %v1680 = vunpack.c.l.b16 %v1624
        %v1681 = vunpack.c.h.b16 %v1624
        %v1682 = vunpack.c.l.b16 %v1625
        %v1683 = vunpack.c.h.b16 %v1625
        %v1684 = vunpack.c.l.b16 %v1626
        %v1685 = vunpack.c.h.b16 %v1626
        %v1686 = vunpack.c.l.b16 %v1627
        %v1687 = vunpack.c.h.b16 %v1627
        %v1688 = vpack.c.b16 %v1658, %v1656
        %v1689 = vpack.c.b16 %v1659, %v1657
        %v1690 = vpack.c.b16 %v1662, %v1660
        %v1691 = vpack.c.b16 %v1663, %v1661
        %v1692 = vpack.c.b16 %v1666, %v1664
        %v1693 = vpack.c.b16 %v1667, %v1665
        %v1694 = vpack.c.b16 %v1670, %v1668
        %v1695 = vpack.c.b16 %v1671, %v1669
        %v1696 = vpack.c.b16 %v1674, %v1672
        %v1697 = vpack.c.b16 %v1675, %v1673
        %v1698 = vpack.c.b16 %v1678, %v1676
        %v1699 = vpack.c.b16 %v1679, %v1677
        %v1700 = vpack.c.b16 %v1682, %v1680
        %v1701 = vpack.c.b16 %v1683, %v1681
        %v1702 = vpack.c.b16 %v1686, %v1684
        %v1703 = vpack.c.b16 %v1687, %v1685
        %1720 = vmatprep.subr.bf16.mxu0 %v1703
        %1721 = vmatpush1.bf16.msra.mxu0 %v1702
        %1722 = vmatprep.subr.bf16.mxu0 %v1701
        %1723 = vmatpush1.bf16.msra.mxu0 %v1700
        %1724 = vmatprep.subr.bf16.mxu0 %v1699
        %1725 = vmatpush1.bf16.msra.mxu0 %v1698
        %1726 = vmatprep.subr.bf16.mxu0 %v1697
        %1727 = vmatpush1.bf16.msra.mxu0 %v1696
        %1728 = vmatprep.subr.bf16.mxu0 %v1695
        %1729 = vmatpush1.bf16.msra.mxu0 %v1694
        %1730 = vmatprep.subr.bf16.mxu0 %v1693
        %1731 = vmatpush1.bf16.msra.mxu0 %v1692
        %1732 = vmatprep.subr.bf16.mxu0 %v1691
        %1733 = vmatpush1.bf16.msra.mxu0 %v1690
        %1734 = vmatprep.subr.bf16.mxu0 %v1689
        %1735 = vmatpush1.bf16.msra.mxu0 %v1688
        %1736 = vmatprep.subr.bf16.mxu0 0
        %1737 = vmatpush2.bf16.msra.mxu0 0
        %1738 = vmatprep.subr.bf16.mxu0 0
        %1739 = vmatpush2.bf16.msra.mxu0 0
        %1740 = vmatprep.subr.bf16.mxu0 0
        %1741 = vmatpush2.bf16.msra.mxu0 0
        %1742 = vmatprep.subr.bf16.mxu0 0
        %1743 = vmatpush2.bf16.msra.mxu0 0
        %1744 = vmatprep.subr.bf16.mxu0 0
        %1745 = vmatpush2.bf16.msra.mxu0 0
        %1746 = vmatprep.subr.bf16.mxu0 0
        %1747 = vmatpush2.bf16.msra.mxu0 0
        %1748 = vmatprep.subr.bf16.mxu0 0
        %1749 = vmatpush2.bf16.msra.mxu0 0
        %1750 = vmatprep.subr.bf16.mxu0 0
        %1751 = vmatpush2.bf16.msra.mxu0 0
        %1752 = vmatprep.mubr.bf16.mxu0 0
        %1753 = vmatmul.mubr.bf16.gmra.mxu0 %v1596
        %v1754 = vpop.f32.mrf.mxu0
        %v1755 = vadd.f32 %v1633, %v1754
        %v1756 = vpop.f32.mrf.mxu0
        %v1757 = vadd.f32 %v1637, %v1756
        %v1758 = vpop.f32.mrf.mxu0
        %v1759 = vadd.f32 %v1633, %v1758
        %v1760 = vpop.f32.mrf.mxu0
        %v1761 = vadd.f32 %v1637, %v1760
        %1762 = vmatprep.mubr.bf16.mxu0 0
        %1763 = vmatmul.mubr.bf16.gmra.mxu0 %v1597
        %v1764 = vpop.f32.mrf.mxu0
        %v1765 = vadd.f32 %v1633, %v1764
        %v1766 = vpop.f32.mrf.mxu0
        %v1767 = vadd.f32 %v1637, %v1766
        %v1768 = vpop.f32.mrf.mxu0
        %v1769 = vadd.f32 %v1633, %v1768
        %v1770 = vpop.f32.mrf.mxu0
        %v1771 = vadd.f32 %v1637, %v1770
        %1772 = vmatprep.mubr.bf16.mxu0 0
        %1773 = vmatmul.mubr.bf16.gmra.mxu0 %v1598
        %v1774 = vpop.f32.mrf.mxu0
        %v1775 = vadd.f32 %v1633, %v1774
        %v1776 = vpop.f32.mrf.mxu0
        %v1777 = vadd.f32 %v1637, %v1776
        %v1778 = vpop.f32.mrf.mxu0
        %v1779 = vadd.f32 %v1633, %v1778
        %v1780 = vpop.f32.mrf.mxu0
        %v1781 = vadd.f32 %v1637, %v1780
        %1782 = vmatprep.mubr.bf16.mxu0 0
        %1783 = vmatmul.mubr.bf16.gmra.mxu0 %v1599
        %v1784 = vpop.f32.mrf.mxu0
        %v1785 = vadd.f32 %v1633, %v1784
        %v1786 = vpop.f32.mrf.mxu0
        %v1787 = vadd.f32 %v1637, %v1786
        %v1788 = vpop.f32.mrf.mxu0
        %v1789 = vadd.f32 %v1633, %v1788
        %v1790 = vpop.f32.mrf.mxu0
        %v1791 = vadd.f32 %v1637, %v1790
        %1792 = vmatprep.mubr.bf16.mxu0 0
        %1793 = vmatmul.mubr.bf16.gmra.mxu0 %v1600
        %v1794 = vpop.f32.mrf.mxu0
        %v1795 = vadd.f32 %v1633, %v1794
        %v1796 = vpop.f32.mrf.mxu0
        %v1797 = vadd.f32 %v1637, %v1796
        %v1798 = vpop.f32.mrf.mxu0
        %v1799 = vadd.f32 %v1633, %v1798
        %v1800 = vpop.f32.mrf.mxu0
        %v1801 = vadd.f32 %v1637, %v1800
        %1802 = vmatprep.mubr.bf16.mxu0 0
        %1803 = vmatmul.mubr.bf16.gmra.mxu0 %v1601
        %v1804 = vpop.f32.mrf.mxu0
        %v1805 = vadd.f32 %v1633, %v1804
        %v1806 = vpop.f32.mrf.mxu0
        %v1807 = vadd.f32 %v1637, %v1806
        %v1808 = vpop.f32.mrf.mxu0
        %v1809 = vadd.f32 %v1633, %v1808
        %v1810 = vpop.f32.mrf.mxu0
        %v1811 = vadd.f32 %v1637, %v1810
        %1812 = vmatprep.mubr.bf16.mxu0 0
        %1813 = vmatmul.mubr.bf16.gmra.mxu0 %v1602
        %v1814 = vpop.f32.mrf.mxu0
        %v1815 = vadd.f32 %v1633, %v1814
        %v1816 = vpop.f32.mrf.mxu0
        %v1817 = vadd.f32 %v1637, %v1816
        %v1818 = vpop.f32.mrf.mxu0
        %v1819 = vadd.f32 %v1633, %v1818
        %v1820 = vpop.f32.mrf.mxu0
        %v1821 = vadd.f32 %v1637, %v1820
        %1822 = vmatprep.mubr.bf16.mxu0 0
        %1823 = vmatmul.mubr.bf16.gmra.mxu0 %v1603
        %v1824 = vpop.f32.mrf.mxu0
        %v1825 = vadd.f32 %v1633, %v1824
        %v1826 = vpop.f32.mrf.mxu0
        %v1827 = vadd.f32 %v1637, %v1826
        %v1828 = vpop.f32.mrf.mxu0
        %v1829 = vadd.f32 %v1633, %v1828
        %v1830 = vpop.f32.mrf.mxu0
        %v1831 = vadd.f32 %v1637, %v1830
        %1832 = vmatprep.mubr.bf16.mxu0 0
        %1833 = vmatmul.mubr.bf16.gmra.mxu0 %v1604
        %v1834 = vpop.f32.mrf.mxu0
        %v1835 = vadd.f32 %v1633, %v1834
        %v1836 = vpop.f32.mrf.mxu0
        %v1837 = vadd.f32 %v1637, %v1836
        %v1838 = vpop.f32.mrf.mxu0
        %v1839 = vadd.f32 %v1633, %v1838
        %v1840 = vpop.f32.mrf.mxu0
        %v1841 = vadd.f32 %v1637, %v1840
        %1842 = vmatprep.mubr.bf16.mxu0 0
        %1843 = vmatmul.mubr.bf16.gmra.mxu0 %v1605
        %v1844 = vpop.f32.mrf.mxu0
        %v1845 = vadd.f32 %v1633, %v1844
        %v1846 = vpop.f32.mrf.mxu0
        %v1847 = vadd.f32 %v1637, %v1846
        %v1848 = vpop.f32.mrf.mxu0
        %v1849 = vadd.f32 %v1633, %v1848
        %v1850 = vpop.f32.mrf.mxu0
        %v1851 = vadd.f32 %v1637, %v1850
        %1852 = vmatprep.mubr.bf16.mxu0 0
        %1853 = vmatmul.mubr.bf16.gmra.mxu0 %v1606
        %v1854 = vpop.f32.mrf.mxu0
        %v1855 = vadd.f32 %v1633, %v1854
        %v1856 = vpop.f32.mrf.mxu0
        %v1857 = vadd.f32 %v1637, %v1856
        %v1858 = vpop.f32.mrf.mxu0
        %v1859 = vadd.f32 %v1633, %v1858
        %v1860 = vpop.f32.mrf.mxu0
        %v1861 = vadd.f32 %v1637, %v1860
        %1862 = vmatprep.mubr.bf16.mxu0 0
        %1863 = vmatmul.mubr.bf16.gmra.mxu0 %v1607
        %v1864 = vpop.f32.mrf.mxu0
        %v1865 = vadd.f32 %v1633, %v1864
        %v1866 = vpop.f32.mrf.mxu0
        %v1867 = vadd.f32 %v1637, %v1866
        %v1868 = vpop.f32.mrf.mxu0
        %v1869 = vadd.f32 %v1633, %v1868
        %v1870 = vpop.f32.mrf.mxu0
        %v1871 = vadd.f32 %v1637, %v1870
        %1872 = vmatprep.mubr.bf16.mxu0 0
        %1873 = vmatmul.mubr.bf16.gmra.mxu0 %v1608
        %v1874 = vpop.f32.mrf.mxu0
        %v1875 = vadd.f32 %v1633, %v1874
        %v1876 = vpop.f32.mrf.mxu0
        %v1877 = vadd.f32 %v1637, %v1876
        %v1878 = vpop.f32.mrf.mxu0
        %v1879 = vadd.f32 %v1633, %v1878
        %v1880 = vpop.f32.mrf.mxu0
        %v1881 = vadd.f32 %v1637, %v1880
        %1882 = vmatprep.mubr.bf16.mxu0 0
        %1883 = vmatmul.mubr.bf16.gmra.mxu0 %v1609
        %v1884 = vpop.f32.mrf.mxu0
        %v1885 = vadd.f32 %v1633, %v1884
        %v1886 = vpop.f32.mrf.mxu0
        %v1887 = vadd.f32 %v1637, %v1886
        %v1888 = vpop.f32.mrf.mxu0
        %v1889 = vadd.f32 %v1633, %v1888
        %v1890 = vpop.f32.mrf.mxu0
        %v1891 = vadd.f32 %v1637, %v1890
        %1892 = vmatprep.mubr.bf16.mxu0 0
        %1893 = vmatmul.mubr.bf16.gmra.mxu0 %v1610
        %v1894 = vpop.f32.mrf.mxu0
        %v1895 = vadd.f32 %v1633, %v1894
        %v1896 = vpop.f32.mrf.mxu0
        %v1897 = vadd.f32 %v1637, %v1896
        %v1898 = vpop.f32.mrf.mxu0
        %v1899 = vadd.f32 %v1633, %v1898
        %v1900 = vpop.f32.mrf.mxu0
        %v1901 = vadd.f32 %v1637, %v1900
        %1902 = vmatprep.mubr.bf16.mxu0 0
        %1903 = vmatmul.mubr.bf16.gmra.mxu0 %v1611
        %v1904 = vpop.f32.mrf.mxu0
        %v1905 = vadd.f32 %v1633, %v1904
        %v1906 = vpop.f32.mrf.mxu0
        %v1907 = vadd.f32 %v1637, %v1906
        %v1908 = vpop.f32.mrf.mxu0
        %v1909 = vadd.f32 %v1633, %v1908
        %v1910 = vpop.f32.mrf.mxu0
        %v1911 = vadd.f32 %v1637, %v1910
        %1912 = vdwg.mxu0
        %v1913 = vpack.c.bf16 %v1759, %v1755
        %v1914 = vpack.c.bf16 %v1761, %v1757
        %v1915 = vpack.c.bf16 %v1769, %v1765
        %v1916 = vpack.c.bf16 %v1771, %v1767
        %v1917 = vpack.c.bf16 %v1779, %v1775
        %v1918 = vpack.c.bf16 %v1781, %v1777
        %v1919 = vpack.c.bf16 %v1789, %v1785
        %v1920 = vpack.c.bf16 %v1791, %v1787
        %v1921 = vpack.c.bf16 %v1799, %v1795
        %v1922 = vpack.c.bf16 %v1801, %v1797
        %v1923 = vpack.c.bf16 %v1809, %v1805
        %v1924 = vpack.c.bf16 %v1811, %v1807
        %v1925 = vpack.c.bf16 %v1819, %v1815
        %v1926 = vpack.c.bf16 %v1821, %v1817
        %v1927 = vpack.c.bf16 %v1829, %v1825
        %v1928 = vpack.c.bf16 %v1831, %v1827
        %v1929 = vpack.c.bf16 %v1839, %v1835
        %v1930 = vpack.c.bf16 %v1841, %v1837
        %v1931 = vpack.c.bf16 %v1849, %v1845
        %v1932 = vpack.c.bf16 %v1851, %v1847
        %v1933 = vpack.c.bf16 %v1859, %v1855
        %v1934 = vpack.c.bf16 %v1861, %v1857
        %v1935 = vpack.c.bf16 %v1869, %v1865
        %v1936 = vpack.c.bf16 %v1871, %v1867
        %v1937 = vpack.c.bf16 %v1879, %v1875
        %v1938 = vpack.c.bf16 %v1881, %v1877
        %v1939 = vpack.c.bf16 %v1889, %v1885
        %v1940 = vpack.c.bf16 %v1891, %v1887
        %v1941 = vpack.c.bf16 %v1899, %v1895
        %v1942 = vpack.c.bf16 %v1901, %v1897
        %v1943 = vpack.c.bf16 %v1909, %v1905
        %v1944 = vpack.c.bf16 %v1911, %v1907
        %v1977 = vunpack.c.l.b16 %v1913
        %v1978 = vunpack.c.l.b16 %v1914
        %v1979 = vunpack.c.h.b16 %v1913
        %v1980 = vunpack.c.h.b16 %v1914
        %v1981 = vunpack.c.l.b16 %v1915
        %v1982 = vunpack.c.l.b16 %v1916
        %v1983 = vunpack.c.h.b16 %v1915
        %v1984 = vunpack.c.h.b16 %v1916
        %v1985 = vunpack.c.l.b16 %v1917
        %v1986 = vunpack.c.l.b16 %v1918
        %v1987 = vunpack.c.h.b16 %v1917
        %v1988 = vunpack.c.h.b16 %v1918
        %v1989 = vunpack.c.l.b16 %v1919
        %v1990 = vunpack.c.l.b16 %v1920
        %v1991 = vunpack.c.h.b16 %v1919
        %v1992 = vunpack.c.h.b16 %v1920
        %v1993 = vunpack.c.l.b16 %v1921
        %v1994 = vunpack.c.l.b16 %v1922
        %v1995 = vunpack.c.h.b16 %v1921
        %v1996 = vunpack.c.h.b16 %v1922
        %v1997 = vunpack.c.l.b16 %v1923
        %v1998 = vunpack.c.l.b16 %v1924
        %v1999 = vunpack.c.h.b16 %v1923
        %v2000 = vunpack.c.h.b16 %v1924
        %v2001 = vunpack.c.l.b16 %v1925
        %v2002 = vunpack.c.l.b16 %v1926
        %v2003 = vunpack.c.h.b16 %v1925
        %v2004 = vunpack.c.h.b16 %v1926
        %v2005 = vunpack.c.l.b16 %v1927
        %v2006 = vunpack.c.l.b16 %v1928
        %v2007 = vunpack.c.h.b16 %v1927
        %v2008 = vunpack.c.h.b16 %v1928
        %v2009 = vunpack.c.l.b16 %v1929
        %v2010 = vunpack.c.l.b16 %v1930
        %v2011 = vunpack.c.h.b16 %v1929
        %v2012 = vunpack.c.h.b16 %v1930
        %v2013 = vunpack.c.l.b16 %v1931
        %v2014 = vunpack.c.l.b16 %v1932
        %v2015 = vunpack.c.h.b16 %v1931
        %v2016 = vunpack.c.h.b16 %v1932
        %v2017 = vunpack.c.l.b16 %v1933
        %v2018 = vunpack.c.l.b16 %v1934
        %v2019 = vunpack.c.h.b16 %v1933
        %v2020 = vunpack.c.h.b16 %v1934
        %v2021 = vunpack.c.l.b16 %v1935
        %v2022 = vunpack.c.l.b16 %v1936
        %v2023 = vunpack.c.h.b16 %v1935
        %v2024 = vunpack.c.h.b16 %v1936
        %v2025 = vunpack.c.l.b16 %v1937
        %v2026 = vunpack.c.l.b16 %v1938
        %v2027 = vunpack.c.h.b16 %v1937
        %v2028 = vunpack.c.h.b16 %v1938
        %v2029 = vunpack.c.l.b16 %v1939
        %v2030 = vunpack.c.l.b16 %v1940
        %v2031 = vunpack.c.h.b16 %v1939
        %v2032 = vunpack.c.h.b16 %v1940
        %v2033 = vunpack.c.l.b16 %v1941
        %v2034 = vunpack.c.l.b16 %v1942
        %v2035 = vunpack.c.h.b16 %v1941
        %v2036 = vunpack.c.h.b16 %v1942
        %v2037 = vunpack.c.l.b16 %v1943
        %v2038 = vunpack.c.l.b16 %v1944
        %v2039 = vunpack.c.h.b16 %v1943
        %v2040 = vunpack.c.h.b16 %v1944
        %v2041 = vpack.c.b16 %v1978, %v1977
        %v2042 = vpack.c.b16 %v1980, %v1979
        %v2043 = vpack.c.b16 %v1982, %v1981
        %v2044 = vpack.c.b16 %v1984, %v1983
        %v2045 = vpack.c.b16 %v1986, %v1985
        %v2046 = vpack.c.b16 %v1988, %v1987
        %v2047 = vpack.c.b16 %v1990, %v1989
        %v2048 = vpack.c.b16 %v1992, %v1991
        %v2049 = vpack.c.b16 %v1994, %v1993
        %v2050 = vpack.c.b16 %v1996, %v1995
        %v2051 = vpack.c.b16 %v1998, %v1997
        %v2052 = vpack.c.b16 %v2000, %v1999
        %v2053 = vpack.c.b16 %v2002, %v2001
        %v2054 = vpack.c.b16 %v2004, %v2003
        %v2055 = vpack.c.b16 %v2006, %v2005
        %v2056 = vpack.c.b16 %v2008, %v2007
        %v2057 = vpack.c.b16 %v2010, %v2009
        %v2058 = vpack.c.b16 %v2012, %v2011
        %v2059 = vpack.c.b16 %v2014, %v2013
        %v2060 = vpack.c.b16 %v2016, %v2015
        %v2061 = vpack.c.b16 %v2018, %v2017
        %v2062 = vpack.c.b16 %v2020, %v2019
        %v2063 = vpack.c.b16 %v2022, %v2021
        %v2064 = vpack.c.b16 %v2024, %v2023
        %v2065 = vpack.c.b16 %v2026, %v2025
        %v2066 = vpack.c.b16 %v2028, %v2027
        %v2067 = vpack.c.b16 %v2030, %v2029
        %v2068 = vpack.c.b16 %v2032, %v2031
        %v2069 = vpack.c.b16 %v2034, %v2033
        %v2070 = vpack.c.b16 %v2036, %v2035
        %v2071 = vpack.c.b16 %v2038, %v2037
        %v2072 = vpack.c.b16 %v2040, %v2039
        %2105 = vst [vmem:[%s457] sm:$0xff] %v2041
        %2106 = vst [vmem:[%s457 + $0x8] sm:$0xff] %v2042
        %2107 = vst [vmem:[%s457 + $0x10] sm:$0xff] %v2043
        %2108 = vst [vmem:[%s457 + $0x18] sm:$0xff] %v2044
        %2109 = vst [vmem:[%s457 + $0x20] sm:$0xff] %v2045
        %2110 = vst [vmem:[%s457 + $0x28] sm:$0xff] %v2046
        %2111 = vst [vmem:[%s457 + $0x30] sm:$0xff] %v2047
        %2112 = vst [vmem:[%s457 + $0x38] sm:$0xff] %v2048
        %2113 = vst [vmem:[%s457 + $0x40] sm:$0xff] %v2049
        %2114 = vst [vmem:[%s457 + $0x48] sm:$0xff] %v2050
        %2115 = vst [vmem:[%s457 + $0x50] sm:$0xff] %v2051
        %2116 = vst [vmem:[%s457 + $0x58] sm:$0xff] %v2052
        %2117 = vst [vmem:[%s457 + $0x60] sm:$0xff] %v2053
        %2118 = vst [vmem:[%s457 + $0x68] sm:$0xff] %v2054
        %2119 = vst [vmem:[%s457 + $0x70] sm:$0xff] %v2055
        %2120 = vst [vmem:[%s457 + $0x78] sm:$0xff] %v2056
        %2121 = vst [vmem:[%s457 + $0x80] sm:$0xff] %v2057
        %2122 = vst [vmem:[%s457 + $0x88] sm:$0xff] %v2058
        %2123 = vst [vmem:[%s457 + $0x90] sm:$0xff] %v2059
        %2124 = vst [vmem:[%s457 + $0x98] sm:$0xff] %v2060
        %2125 = vst [vmem:[%s457 + $0xa0] sm:$0xff] %v2061
        %2126 = vst [vmem:[%s457 + $0xa8] sm:$0xff] %v2062
        %2127 = vst [vmem:[%s457 + $0xb0] sm:$0xff] %v2063
        %2128 = vst [vmem:[%s457 + $0xb8] sm:$0xff] %v2064
        %2129 = vst [vmem:[%s457 + $0xc0] sm:$0xff] %v2065
        %2130 = vst [vmem:[%s457 + $0xc8] sm:$0xff] %v2066
        %2131 = vst [vmem:[%s457 + $0xd0] sm:$0xff] %v2067
        %2132 = vst [vmem:[%s457 + $0xd8] sm:$0xff] %v2068
        %2133 = vst [vmem:[%s457 + $0xe0] sm:$0xff] %v2069
        %2134 = vst [vmem:[%s457 + $0xe8] sm:$0xff] %v2070
        %2135 = vst [vmem:[%s457 + $0xf0] sm:$0xff] %v2071
        %2136 = vst [vmem:[%s457 + $0xf8] sm:$0xff] %v2072
        %s2137 = smul.u32 32, %s31
        %p2138 = scmp.lt.s32.totalorder %s2137, 63
        %s2139 = scalar_select %p2138, %s2137, 63
        %s2140 = smul.addr %s2139, 4
        %s2141 = scalar_lea.vmem %s9, %s2140
        %s2142 = sand.u32 %s259, 1
        %s2143 = scalar_lea.sflag [#allocation4], %s2142
        %s2144 = sand.u32 %s259, 1
        %s2145 = smul.addr %s2144, 256
        %s2146 = scalar_lea.vmem [#allocation13], %s2145
        // Predicated region
        $region81: #{forward.1} parent=55 // pred_check
          %p2147 = pneg %p243
        $region82: #{forward.1} parent=55 // pred_check_branch
          %2149 = sbr.rel (%p2147) target = $region84
        $region83: #{forward.1} parent=55 // pred_region
          %s2150 = smul.u32 32, %s31
        $region84: #{forward.1} parent=55 // pred_fallthru
          _
        // Predicated region
        $region85: #{forward.1} parent=55 // pred_check
          %p2151 = pneg %p269
        $region86: #{forward.1} parent=55 // pred_check_branch
          %2153 = sbr.rel (%p2151) target = $region88
        $region87: #{forward.1} parent=55 // pred_region
          %s2154 = smul.u32 32, %s31
          %s2156 = ssub.s32 4096, 4096
          %2157 = vsyncadd %s2143, %s2156
          %s2158 = smul.addr %s2154, 2
          %s2159 = smul.addr %s2158, 64
          %s2160 = scalar_lea.hbm %s10, %s2159
          %s2161 = sshll.u32 %s2146, 4
          %s2162 = int_to_ptr.vmem [resolvable:$true] %s2161
          %2167 = dma.vmem_to_hbm [thread:$0]  %s2162, 4096, %s2160, %s2143, 128, 128, 8
        $region88: #{forward.1} parent=55 // pred_fallthru
          _
      $region56: #{forward.1} parent=5 // pred_fallthru
        _
      %p2168 = scmp.le.s32.totalorder 2, %s26
      // Predicated region
      $region89: #{forward.1} parent=5 // pred_check
        %p2169 = pneg %p2168
      $region90: #{forward.1} parent=5 // pred_check_branch
        %2171 = sbr.rel (%p2169) target = $region92
      $region91: #{forward.1} parent=5 // pred_region
        %s2172 = ssub.s32 %s26, 2
        // Predicated region
        $region93: #{forward.1} parent=91 // pred_check
          %p2173 = pneg %p249
        $region94: #{forward.1} parent=91 // pred_check_branch
          %2175 = sbr.rel (%p2173) target = $region96
        $region95: #{forward.1} parent=91 // pred_region
          %s2176 = smul.u32 32, %s32
          %p2177 = scmp.lt.s32.totalorder %s2176, 63
          %s2178 = scalar_select %p2177, %s2176, 63
          %s2179 = smul.addr %s2178, 4
          %s2180 = scalar_lea.vmem %s9, %s2179
        $region96: #{forward.1} parent=91 // pred_fallthru
          _
        // Predicated region
        $region97: #{forward.1} parent=91 // pred_check
          %p2181 = pneg %p275
        $region98: #{forward.1} parent=91 // pred_check_branch
          %2183 = sbr.rel (%p2181) target = $region100
        $region99: #{forward.1} parent=91 // pred_region
          %s2184 = sand.u32 %s260, 1
          %s2185 = scalar_lea.sflag [#allocation4], %s2184
          %s2186 = sand.u32 %s260, 1
          %s2187 = smul.addr %s2186, 256
          %s2188 = scalar_lea.vmem [#allocation13], %s2187
          %2189 = dma.done %s2185, 4096
        $region100: #{forward.1} parent=91 // pred_fallthru
          _
      $region92: #{forward.1} parent=5 // pred_fallthru
        _
    $region6: #{forward.1} parent=1 // loop_footer
      %s30 = sadd.s32 1, %s26
    $region7: #{forward.1} parent=1 // loop_footer_branch
      %25 = sbr.rel target = $region3
    $region8: #{forward.1} parent=1 // loop_exit
      _
    %2190 = vsyncpa [#allocation3], 1
    %s2191 = scalar_lea.sflag [#allocation3], 1
    %2192 = vsyncpa %s2191, 1
    %2193 = vsyncpa [#allocation6], 1
    %2194 = vsyncpa [#allocation9], 1
    %2195 = vsyncpa [#allocation12], 1
    %2196 = vsyncpa [#allocation4], 1
    %s2197 = scalar_lea.sflag [#allocation4], 1
    %2198 = vsyncpa %s2197, 1

</llo_original>
